<compile_context>
chip_gen: v7x
topology: tpu7x:2x2x1
jax: 0.10.0
libtpu: 0.0.40
codegen_flags: <defaults>
</compile_context>

<pallas_src>
import functools

import jax
import jax.numpy as jnp
from jax.experimental import pallas as pl
from jax.experimental.pallas import tpu as pltpu  # noqa: F401  (TPU backend)


# ----------------------------------------------------------------------------
# Fused Pallas kernel: LSTM layer 1 + LSTM layer 2 + Linear head
# ----------------------------------------------------------------------------
def _fused_lstm_predictor_kernel(
    x_ref,      # (T*B, Din)  time-major input, flattened over (t, b)
    wih1_ref,   # (Din, 4H)
    whh1_ref,   # (H, 4H)
    b1_ref,     # (1, 4H)     b_ih + b_hh of layer 1
    wih2_ref,   # (H, 4H)
    whh2_ref,   # (H, 4H)
    b2_ref,     # (1, 4H)     b_ih + b_hh of layer 2
    wlin_ref,   # (H, O)
    blin_ref,   # (1, O)
    out_ref,    # (B, O)
    *,
    T: int,
    B: int,
    H: int,
):
    # ---- Hoisted input projection for layer 1 (single MXU matmul) ----
    gates_in1 = (
        jnp.dot(x_ref[...], wih1_ref[...], preferred_element_type=jnp.float32)
        + b1_ref[...]
    )  # (T*B, 4H)

    # Load weights once; they stay resident as values for the whole recurrence.
    whh1 = whh1_ref[...]
    wih2 = wih2_ref[...]
    whh2 = whh2_ref[...]
    b2 = b2_ref[...]

    def gate_act(gates):
        # PyTorch gate order: i, f, g, o
        i_g = jax.nn.sigmoid(gates[:, 0 * H:1 * H])
        f_g = jax.nn.sigmoid(gates[:, 1 * H:2 * H])
        g_g = jnp.tanh(gates[:, 2 * H:3 * H])
        o_g = jax.nn.sigmoid(gates[:, 3 * H:4 * H])
        return i_g, f_g, g_g, o_g

    h1 = jnp.zeros((B, H), jnp.float32)
    c1 = jnp.zeros((B, H), jnp.float32)
    h2 = jnp.zeros((B, H), jnp.float32)
    c2 = jnp.zeros((B, H), jnp.float32)

    # Time recurrence: statically unrolled (T is small and the loop-carried
    # dependency on h/c cannot be pipelined anyway). Both layers advance in
    # lock-step: layer 2 at time t consumes layer-1's h at the same t.
    for t in range(T):
        # ---- Layer 1 (input projection precomputed) ----
        g1 = gates_in1[t * B:(t + 1) * B, :] + jnp.dot(
            h1, whh1, preferred_element_type=jnp.float32
        )
        i1, f1, gg1, o1 = gate_act(g1)
        c1 = f1 * c1 + i1 * gg1
        h1 = o1 * jnp.tanh(c1)

        # ---- Layer 2 ----
        g2 = (
            jnp.dot(h1, wih2, preferred_element_type=jnp.float32)
            + jnp.dot(h2, whh2, preferred_element_type=jnp.float32)
            + b2
        )
        i2, f2, gg2, o2 = gate_act(g2)
        c2 = f2 * c2 + i2 * gg2
        h2 = o2 * jnp.tanh(c2)

    # ---- Linear head on the last hidden state of the top layer ----
    out_ref[...] = (
        jnp.dot(h2, wlin_ref[...], preferred_element_type=jnp.float32)
        + blin_ref[...]
    ).astype(out_ref.dtype)


# ----------------------------------------------------------------------------
# Wrapper
# ----------------------------------------------------------------------------
@jax.jit
def lstm_predictor_forward(params, x_btd):
    """x_btd: (B, T, input_dim) batch_first, like PyTorch. Returns (B, output_dim)."""
    B, T, Din = x_btd.shape
    assert len(params["layers"]) == 2, "fused kernel is specialized to num_layers=2"
    l1, l2 = params["layers"]
    H = l1["w_hh_t"].shape[0]
    O = params["linear"]["w_t"].shape[1]

    # time-major, flattened over (t, b) so the layer-1 input projection is one
    # lane-dense (T*B, Din) @ (Din, 4H) matmul inside the kernel.
    x_flat = (
        jnp.transpose(x_btd, (1, 0, 2)).astype(jnp.float32).reshape(T * B, Din)
    )

    kernel = functools.partial(_fused_lstm_predictor_kernel, T=T, B=B, H=H)
    return pl.pallas_call(
        kernel,
        out_shape=jax.ShapeDtypeStruct((B, O), jnp.float32),
        # No grid / specs: whole (tiny) operands live in VMEM for the single
        # kernel invocation; only the final (B, O) prediction is written back.
    )(
        x_flat,
        l1["w_ih_t"], l1["w_hh_t"], l1["bias"],
        l2["w_ih_t"], l2["w_hh_t"], l2["bias"],
        params["linear"]["w_t"], params["linear"]["b"],
    )


def init_params(key, input_dim, hidden_dim, num_layers, output_dim):
    """Deterministic init mimicking PyTorch's uniform(-1/sqrt(H), 1/sqrt(H))."""
    params = {"layers": []}
    scale = 1.0 / jnp.sqrt(jnp.float32(hidden_dim))
    for layer in range(num_layers):
        d_in = input_dim if layer == 0 else hidden_dim
        key, k1, k2, k3, k4 = jax.random.split(key, 5)
        w_ih = jax.random.uniform(k1, (4 * hidden_dim, d_in), jnp.float32, -scale, scale)
        w_hh = jax.random.uniform(k2, (4 * hidden_dim, hidden_dim), jnp.float32, -scale, scale)
        b_ih = jax.random.uniform(k3, (4 * hidden_dim,), jnp.float32, -scale, scale)
        b_hh = jax.random.uniform(k4, (4 * hidden_dim,), jnp.float32, -scale, scale)
        params["layers"].append(
            {
                "w_ih_t": w_ih.T,                # (d_in, 4H)
                "w_hh_t": w_hh.T,                # (H, 4H)
                "bias": (b_ih + b_hh)[None, :],  # (1, 4H)
            }
        )
    key, k5, k6 = jax.random.split(key, 3)
    lin_scale = 1.0 / jnp.sqrt(jnp.float32(hidden_dim))
    w_lin = jax.random.uniform(k5, (output_dim, hidden_dim), jnp.float32, -lin_scale, lin_scale)
    b_lin = jax.random.uniform(k6, (output_dim,), jnp.float32, -lin_scale, lin_scale)
    params["linear"] = {"w_t": w_lin.T, "b": b_lin[None, :]}  # (H, O), (1, O)
    return params


# ----------------------------------------------------------------------------
# Pure-JAX reference (for verification)
# ----------------------------------------------------------------------------
def _reference_forward(params, x_btd):
    x = jnp.transpose(x_btd, (1, 0, 2)).astype(jnp.float32)  # (T, B, D)
    for lp in params["layers"]:
        T, B, _ = x.shape
        H = lp["w_hh_t"].shape[0]
        h = jnp.zeros((B, H), jnp.float32)
        c = jnp.zeros((B, H), jnp.float32)
        outs = []
        for t in range(T):
            gates = x[t] @ lp["w_ih_t"] + h @ lp["w_hh_t"] + lp["bias"]
            i_g = jax.nn.sigmoid(gates[:, 0 * H:1 * H])
            f_g = jax.nn.sigmoid(gates[:, 1 * H:2 * H])
            g_g = jnp.tanh(gates[:, 2 * H:3 * H])
            o_g = jax.nn.sigmoid(gates[:, 3 * H:4 * H])
            c = f_g * c + i_g * g_g
            h = o_g * jnp.tanh(c)
            outs.append(h)
        x = jnp.stack(outs, axis=0)
    return x[-1] @ params["linear"]["w_t"] + params["linear"]["b"]


if __name__ == "__main__":
    # Small shapes consistent with the module: batch=2, seq=8, input_dim=4,
    # hidden_dim=32, num_layers=2, output_dim=1.
    B, T, D, H, L, O = 2, 8, 4, 32, 2, 1

    key = jax.random.PRNGKey(0)
    key, pkey, xkey = jax.random.split(key, 3)
    params = init_params(pkey, input_dim=D, hidden_dim=H, num_layers=L, output_dim=O)
    x = jax.random.normal(xkey, (B, T, D), jnp.float32)

    out = lstm_predictor_forward(params, x)
    out = jax.block_until_ready(out)
    assert out.shape == (B, O), out.shape

    ref = _reference_forward(params, x)
    assert jnp.allclose(out, ref, atol=1e-5, rtol=1e-5), (out, ref)

    print("KERNEL_OK")
</pallas_src>

<mosaic_0001>
module attributes {stable_mosaic.version = 11 : i64} {
  func.func @_fused_lstm_predictor_kernel(%arg0: memref<16x4xf32, #tpu.memory_space<vmem>>, %arg1: memref<4x128xf32, #tpu.memory_space<vmem>>, %arg2: memref<32x128xf32, #tpu.memory_space<vmem>>, %arg3: memref<1x128xf32, #tpu.memory_space<vmem>>, %arg4: memref<32x128xf32, #tpu.memory_space<vmem>>, %arg5: memref<32x128xf32, #tpu.memory_space<vmem>>, %arg6: memref<1x128xf32, #tpu.memory_space<vmem>>, %arg7: memref<32x1xf32, #tpu.memory_space<vmem>>, %arg8: memref<1x1xf32, #tpu.memory_space<vmem>>, %arg9: memref<2x1xf32, #tpu.memory_space<vmem>>) attributes {dimension_semantics = [], scalar_prefetch = 0 : i64, scratch_operands = 0 : i64, tpu.core_type = #tpu.core_type<tc>} {
    %c0 = arith.constant 0 : index
    %c0_0 = arith.constant 0 : index
    %0 = vector.load %arg0[%c0, %c0_0] : memref<16x4xf32, #tpu.memory_space<vmem>>, vector<16x4xf32>
    %c0_1 = arith.constant 0 : index
    %c0_2 = arith.constant 0 : index
    %1 = vector.load %arg1[%c0_1, %c0_2] : memref<4x128xf32, #tpu.memory_space<vmem>>, vector<4x128xf32>
    %cst = arith.constant dense<0.000000e+00> : vector<16x128xf32>
    %2 = tpu.matmul %0, %1, %cst {dimension_numbers = #tpu.dot_dimension_numbers<[1], [0], [0], [1], [0, 0, 1, 1], [], []>} : vector<16x4xf32>, vector<4x128xf32>, vector<16x128xf32> -> vector<16x128xf32>
    %c0_3 = arith.constant 0 : index
    %c0_4 = arith.constant 0 : index
    %3 = vector.load %arg3[%c0_3, %c0_4] : memref<1x128xf32, #tpu.memory_space<vmem>>, vector<1x128xf32>
    %4 = vector.broadcast %3 : vector<1x128xf32> to vector<16x128xf32>
    %5 = arith.addf %2, %4 : vector<16x128xf32>
    %c0_5 = arith.constant 0 : index
    %c0_6 = arith.constant 0 : index
    %6 = vector.load %arg2[%c0_5, %c0_6] : memref<32x128xf32, #tpu.memory_space<vmem>>, vector<32x128xf32>
    %c0_7 = arith.constant 0 : index
    %c0_8 = arith.constant 0 : index
    %7 = vector.load %arg4[%c0_7, %c0_8] : memref<32x128xf32, #tpu.memory_space<vmem>>, vector<32x128xf32>
    %c0_9 = arith.constant 0 : index
    %c0_10 = arith.constant 0 : index
    %8 = vector.load %arg5[%c0_9, %c0_10] : memref<32x128xf32, #tpu.memory_space<vmem>>, vector<32x128xf32>
    %c0_11 = arith.constant 0 : index
    %c0_12 = arith.constant 0 : index
    %9 = vector.load %arg6[%c0_11, %c0_12] : memref<1x128xf32, #tpu.memory_space<vmem>>, vector<1x128xf32>
    %cst_13 = arith.constant 0.000000e+00 : f32
    %10 = vector.broadcast %cst_13 : f32 to vector<2x32xf32>
    %cst_14 = arith.constant 0.000000e+00 : f32
    %11 = vector.broadcast %cst_14 : f32 to vector<2x32xf32>
    %cst_15 = arith.constant 0.000000e+00 : f32
    %12 = vector.broadcast %cst_15 : f32 to vector<2x32xf32>
    %cst_16 = arith.constant 0.000000e+00 : f32
    %13 = vector.broadcast %cst_16 : f32 to vector<2x32xf32>
    %14 = vector.extract_strided_slice %5 {offsets = [0, 0], sizes = [2, 128], strides = [1, 1]} : vector<16x128xf32> to vector<2x128xf32>
    %cst_17 = arith.constant dense<0.000000e+00> : vector<2x128xf32>
    %15 = tpu.matmul %10, %6, %cst_17 {dimension_numbers = #tpu.dot_dimension_numbers<[1], [0], [0], [1], [0, 0, 1, 1], [], []>} : vector<2x32xf32>, vector<32x128xf32>, vector<2x128xf32> -> vector<2x128xf32>
    %16 = arith.addf %14, %15 : vector<2x128xf32>
    %17 = vector.extract_strided_slice %16 {offsets = [0, 0], sizes = [2, 32], strides = [1, 1]} : vector<2x128xf32> to vector<2x32xf32>
    %18 = arith.negf %17 : vector<2x32xf32>
    %19 = math.exp %18 : vector<2x32xf32>
    %cst_18 = arith.constant 1.000000e+00 : f32
    %20 = vector.broadcast %cst_18 : f32 to vector<2x32xf32>
    %21 = arith.addf %20, %19 : vector<2x32xf32>
    %22 = arith.divf %20, %21 : vector<2x32xf32>
    %23 = vector.extract_strided_slice %16 {offsets = [0, 32], sizes = [2, 32], strides = [1, 1]} : vector<2x128xf32> to vector<2x32xf32>
    %24 = arith.negf %23 : vector<2x32xf32>
    %25 = math.exp %24 : vector<2x32xf32>
    %cst_19 = arith.constant 1.000000e+00 : f32
    %26 = vector.broadcast %cst_19 : f32 to vector<2x32xf32>
    %27 = arith.addf %26, %25 : vector<2x32xf32>
    %28 = arith.divf %26, %27 : vector<2x32xf32>
    %29 = vector.extract_strided_slice %16 {offsets = [0, 64], sizes = [2, 32], strides = [1, 1]} : vector<2x128xf32> to vector<2x32xf32>
    %30 = math.tanh %29 : vector<2x32xf32>
    %31 = vector.extract_strided_slice %16 {offsets = [0, 96], sizes = [2, 32], strides = [1, 1]} : vector<2x128xf32> to vector<2x32xf32>
    %32 = arith.negf %31 : vector<2x32xf32>
    %33 = math.exp %32 : vector<2x32xf32>
    %cst_20 = arith.constant 1.000000e+00 : f32
    %34 = vector.broadcast %cst_20 : f32 to vector<2x32xf32>
    %35 = arith.addf %34, %33 : vector<2x32xf32>
    %36 = arith.divf %34, %35 : vector<2x32xf32>
    %37 = arith.mulf %28, %11 : vector<2x32xf32>
    %38 = arith.mulf %22, %30 : vector<2x32xf32>
    %39 = arith.addf %37, %38 : vector<2x32xf32>
    %40 = math.tanh %39 : vector<2x32xf32>
    %41 = arith.mulf %36, %40 : vector<2x32xf32>
    %cst_21 = arith.constant dense<0.000000e+00> : vector<2x128xf32>
    %42 = tpu.matmul %41, %7, %cst_21 {dimension_numbers = #tpu.dot_dimension_numbers<[1], [0], [0], [1], [0, 0, 1, 1], [], []>} : vector<2x32xf32>, vector<32x128xf32>, vector<2x128xf32> -> vector<2x128xf32>
    %cst_22 = arith.constant dense<0.000000e+00> : vector<2x128xf32>
    %43 = tpu.matmul %12, %8, %cst_22 {dimension_numbers = #tpu.dot_dimension_numbers<[1], [0], [0], [1], [0, 0, 1, 1], [], []>} : vector<2x32xf32>, vector<32x128xf32>, vector<2x128xf32> -> vector<2x128xf32>
    %44 = arith.addf %42, %43 : vector<2x128xf32>
    %45 = vector.broadcast %9 : vector<1x128xf32> to vector<2x128xf32>
    %46 = arith.addf %44, %45 : vector<2x128xf32>
    %47 = vector.extract_strided_slice %46 {offsets = [0, 0], sizes = [2, 32], strides = [1, 1]} : vector<2x128xf32> to vector<2x32xf32>
    %48 = arith.negf %47 : vector<2x32xf32>
    %49 = math.exp %48 : vector<2x32xf32>
    %cst_23 = arith.constant 1.000000e+00 : f32
    %50 = vector.broadcast %cst_23 : f32 to vector<2x32xf32>
    %51 = arith.addf %50, %49 : vector<2x32xf32>
    %52 = arith.divf %50, %51 : vector<2x32xf32>
    %53 = vector.extract_strided_slice %46 {offsets = [0, 32], sizes = [2, 32], strides = [1, 1]} : vector<2x128xf32> to vector<2x32xf32>
    %54 = arith.negf %53 : vector<2x32xf32>
    %55 = math.exp %54 : vector<2x32xf32>
    %cst_24 = arith.constant 1.000000e+00 : f32
    %56 = vector.broadcast %cst_24 : f32 to vector<2x32xf32>
    %57 = arith.addf %56, %55 : vector<2x32xf32>
    %58 = arith.divf %56, %57 : vector<2x32xf32>
    %59 = vector.extract_strided_slice %46 {offsets = [0, 64], sizes = [2, 32], strides = [1, 1]} : vector<2x128xf32> to vector<2x32xf32>
    %60 = math.tanh %59 : vector<2x32xf32>
    %61 = vector.extract_strided_slice %46 {offsets = [0, 96], sizes = [2, 32], strides = [1, 1]} : vector<2x128xf32> to vector<2x32xf32>
    %62 = arith.negf %61 : vector<2x32xf32>
    %63 = math.exp %62 : vector<2x32xf32>
    %cst_25 = arith.constant 1.000000e+00 : f32
    %64 = vector.broadcast %cst_25 : f32 to vector<2x32xf32>
    %65 = arith.addf %64, %63 : vector<2x32xf32>
    %66 = arith.divf %64, %65 : vector<2x32xf32>
    %67 = arith.mulf %58, %13 : vector<2x32xf32>
    %68 = arith.mulf %52, %60 : vector<2x32xf32>
    %69 = arith.addf %67, %68 : vector<2x32xf32>
    %70 = math.tanh %69 : vector<2x32xf32>
    %71 = arith.mulf %66, %70 : vector<2x32xf32>
    %72 = vector.extract_strided_slice %5 {offsets = [2, 0], sizes = [2, 128], strides = [1, 1]} : vector<16x128xf32> to vector<2x128xf32>
    %cst_26 = arith.constant dense<0.000000e+00> : vector<2x128xf32>
    %73 = tpu.matmul %41, %6, %cst_26 {dimension_numbers = #tpu.dot_dimension_numbers<[1], [0], [0], [1], [0, 0, 1, 1], [], []>} : vector<2x32xf32>, vector<32x128xf32>, vector<2x128xf32> -> vector<2x128xf32>
    %74 = arith.addf %72, %73 : vector<2x128xf32>
    %75 = vector.extract_strided_slice %74 {offsets = [0, 0], sizes = [2, 32], strides = [1, 1]} : vector<2x128xf32> to vector<2x32xf32>
    %76 = arith.negf %75 : vector<2x32xf32>
    %77 = math.exp %76 : vector<2x32xf32>
    %cst_27 = arith.constant 1.000000e+00 : f32
    %78 = vector.broadcast %cst_27 : f32 to vector<2x32xf32>
    %79 = arith.addf %78, %77 : vector<2x32xf32>
    %80 = arith.divf %78, %79 : vector<2x32xf32>
    %81 = vector.extract_strided_slice %74 {offsets = [0, 32], sizes = [2, 32], strides = [1, 1]} : vector<2x128xf32> to vector<2x32xf32>
    %82 = arith.negf %81 : vector<2x32xf32>
    %83 = math.exp %82 : vector<2x32xf32>
    %cst_28 = arith.constant 1.000000e+00 : f32
    %84 = vector.broadcast %cst_28 : f32 to vector<2x32xf32>
    %85 = arith.addf %84, %83 : vector<2x32xf32>
    %86 = arith.divf %84, %85 : vector<2x32xf32>
    %87 = vector.extract_strided_slice %74 {offsets = [0, 64], sizes = [2, 32], strides = [1, 1]} : vector<2x128xf32> to vector<2x32xf32>
    %88 = math.tanh %87 : vector<2x32xf32>
    %89 = vector.extract_strided_slice %74 {offsets = [0, 96], sizes = [2, 32], strides = [1, 1]} : vector<2x128xf32> to vector<2x32xf32>
    %90 = arith.negf %89 : vector<2x32xf32>
    %91 = math.exp %90 : vector<2x32xf32>
    %cst_29 = arith.constant 1.000000e+00 : f32
    %92 = vector.broadcast %cst_29 : f32 to vector<2x32xf32>
    %93 = arith.addf %92, %91 : vector<2x32xf32>
    %94 = arith.divf %92, %93 : vector<2x32xf32>
    %95 = arith.mulf %86, %39 : vector<2x32xf32>
    %96 = arith.mulf %80, %88 : vector<2x32xf32>
    %97 = arith.addf %95, %96 : vector<2x32xf32>
    %98 = math.tanh %97 : vector<2x32xf32>
    %99 = arith.mulf %94, %98 : vector<2x32xf32>
    %cst_30 = arith.constant dense<0.000000e+00> : vector<2x128xf32>
    %100 = tpu.matmul %99, %7, %cst_30 {dimension_numbers = #tpu.dot_dimension_numbers<[1], [0], [0], [1], [0, 0, 1, 1], [], []>} : vector<2x32xf32>, vector<32x128xf32>, vector<2x128xf32> -> vector<2x128xf32>
    %cst_31 = arith.constant dense<0.000000e+00> : vector<2x128xf32>
    %101 = tpu.matmul %71, %8, %cst_31 {dimension_numbers = #tpu.dot_dimension_numbers<[1], [0], [0], [1], [0, 0, 1, 1], [], []>} : vector<2x32xf32>, vector<32x128xf32>, vector<2x128xf32> -> vector<2x128xf32>
    %102 = arith.addf %100, %101 : vector<2x128xf32>
    %103 = vector.broadcast %9 : vector<1x128xf32> to vector<2x128xf32>
    %104 = arith.addf %102, %103 : vector<2x128xf32>
    %105 = vector.extract_strided_slice %104 {offsets = [0, 0], sizes = [2, 32], strides = [1, 1]} : vector<2x128xf32> to vector<2x32xf32>
    %106 = arith.negf %105 : vector<2x32xf32>
    %107 = math.exp %106 : vector<2x32xf32>
    %cst_32 = arith.constant 1.000000e+00 : f32
    %108 = vector.broadcast %cst_32 : f32 to vector<2x32xf32>
    %109 = arith.addf %108, %107 : vector<2x32xf32>
    %110 = arith.divf %108, %109 : vector<2x32xf32>
    %111 = vector.extract_strided_slice %104 {offsets = [0, 32], sizes = [2, 32], strides = [1, 1]} : vector<2x128xf32> to vector<2x32xf32>
    %112 = arith.negf %111 : vector<2x32xf32>
    %113 = math.exp %112 : vector<2x32xf32>
    %cst_33 = arith.constant 1.000000e+00 : f32
    %114 = vector.broadcast %cst_33 : f32 to vector<2x32xf32>
    %115 = arith.addf %114, %113 : vector<2x32xf32>
    %116 = arith.divf %114, %115 : vector<2x32xf32>
    %117 = vector.extract_strided_slice %104 {offsets = [0, 64], sizes = [2, 32], strides = [1, 1]} : vector<2x128xf32> to vector<2x32xf32>
    %118 = math.tanh %117 : vector<2x32xf32>
    %119 = vector.extract_strided_slice %104 {offsets = [0, 96], sizes = [2, 32], strides = [1, 1]} : vector<2x128xf32> to vector<2x32xf32>
    %120 = arith.negf %119 : vector<2x32xf32>
    %121 = math.exp %120 : vector<2x32xf32>
    %cst_34 = arith.constant 1.000000e+00 : f32
    %122 = vector.broadcast %cst_34 : f32 to vector<2x32xf32>
    %123 = arith.addf %122, %121 : vector<2x32xf32>
    %124 = arith.divf %122, %123 : vector<2x32xf32>
    %125 = arith.mulf %116, %69 : vector<2x32xf32>
    %126 = arith.mulf %110, %118 : vector<2x32xf32>
    %127 = arith.addf %125, %126 : vector<2x32xf32>
    %128 = math.tanh %127 : vector<2x32xf32>
    %129 = arith.mulf %124, %128 : vector<2x32xf32>
    %130 = vector.extract_strided_slice %5 {offsets = [4, 0], sizes = [2, 128], strides = [1, 1]} : vector<16x128xf32> to vector<2x128xf32>
    %cst_35 = arith.constant dense<0.000000e+00> : vector<2x128xf32>
    %131 = tpu.matmul %99, %6, %cst_35 {dimension_numbers = #tpu.dot_dimension_numbers<[1], [0], [0], [1], [0, 0, 1, 1], [], []>} : vector<2x32xf32>, vector<32x128xf32>, vector<2x128xf32> -> vector<2x128xf32>
    %132 = arith.addf %130, %131 : vector<2x128xf32>
    %133 = vector.extract_strided_slice %132 {offsets = [0, 0], sizes = [2, 32], strides = [1, 1]} : vector<2x128xf32> to vector<2x32xf32>
    %134 = arith.negf %133 : vector<2x32xf32>
    %135 = math.exp %134 : vector<2x32xf32>
    %cst_36 = arith.constant 1.000000e+00 : f32
    %136 = vector.broadcast %cst_36 : f32 to vector<2x32xf32>
    %137 = arith.addf %136, %135 : vector<2x32xf32>
    %138 = arith.divf %136, %137 : vector<2x32xf32>
    %139 = vector.extract_strided_slice %132 {offsets = [0, 32], sizes = [2, 32], strides = [1, 1]} : vector<2x128xf32> to vector<2x32xf32>
    %140 = arith.negf %139 : vector<2x32xf32>
    %141 = math.exp %140 : vector<2x32xf32>
    %cst_37 = arith.constant 1.000000e+00 : f32
    %142 = vector.broadcast %cst_37 : f32 to vector<2x32xf32>
    %143 = arith.addf %142, %141 : vector<2x32xf32>
    %144 = arith.divf %142, %143 : vector<2x32xf32>
    %145 = vector.extract_strided_slice %132 {offsets = [0, 64], sizes = [2, 32], strides = [1, 1]} : vector<2x128xf32> to vector<2x32xf32>
    %146 = math.tanh %145 : vector<2x32xf32>
    %147 = vector.extract_strided_slice %132 {offsets = [0, 96], sizes = [2, 32], strides = [1, 1]} : vector<2x128xf32> to vector<2x32xf32>
    %148 = arith.negf %147 : vector<2x32xf32>
    %149 = math.exp %148 : vector<2x32xf32>
    %cst_38 = arith.constant 1.000000e+00 : f32
    %150 = vector.broadcast %cst_38 : f32 to vector<2x32xf32>
    %151 = arith.addf %150, %149 : vector<2x32xf32>
    %152 = arith.divf %150, %151 : vector<2x32xf32>
    %153 = arith.mulf %144, %97 : vector<2x32xf32>
    %154 = arith.mulf %138, %146 : vector<2x32xf32>
    %155 = arith.addf %153, %154 : vector<2x32xf32>
    %156 = math.tanh %155 : vector<2x32xf32>
    %157 = arith.mulf %152, %156 : vector<2x32xf32>
    %cst_39 = arith.constant dense<0.000000e+00> : vector<2x128xf32>
    %158 = tpu.matmul %157, %7, %cst_39 {dimension_numbers = #tpu.dot_dimension_numbers<[1], [0], [0], [1], [0, 0, 1, 1], [], []>} : vector<2x32xf32>, vector<32x128xf32>, vector<2x128xf32> -> vector<2x128xf32>
    %cst_40 = arith.constant dense<0.000000e+00> : vector<2x128xf32>
    %159 = tpu.matmul %129, %8, %cst_40 {dimension_numbers = #tpu.dot_dimension_numbers<[1], [0], [0], [1], [0, 0, 1, 1], [], []>} : vector<2x32xf32>, vector<32x128xf32>, vector<2x128xf32> -> vector<2x128xf32>
    %160 = arith.addf %158, %159 : vector<2x128xf32>
    %161 = vector.broadcast %9 : vector<1x128xf32> to vector<2x128xf32>
    %162 = arith.addf %160, %161 : vector<2x128xf32>
    %163 = vector.extract_strided_slice %162 {offsets = [0, 0], sizes = [2, 32], strides = [1, 1]} : vector<2x128xf32> to vector<2x32xf32>
    %164 = arith.negf %163 : vector<2x32xf32>
    %165 = math.exp %164 : vector<2x32xf32>
    %cst_41 = arith.constant 1.000000e+00 : f32
    %166 = vector.broadcast %cst_41 : f32 to vector<2x32xf32>
    %167 = arith.addf %166, %165 : vector<2x32xf32>
    %168 = arith.divf %166, %167 : vector<2x32xf32>
    %169 = vector.extract_strided_slice %162 {offsets = [0, 32], sizes = [2, 32], strides = [1, 1]} : vector<2x128xf32> to vector<2x32xf32>
    %170 = arith.negf %169 : vector<2x32xf32>
    %171 = math.exp %170 : vector<2x32xf32>
    %cst_42 = arith.constant 1.000000e+00 : f32
    %172 = vector.broadcast %cst_42 : f32 to vector<2x32xf32>
    %173 = arith.addf %172, %171 : vector<2x32xf32>
    %174 = arith.divf %172, %173 : vector<2x32xf32>
    %175 = vector.extract_strided_slice %162 {offsets = [0, 64], sizes = [2, 32], strides = [1, 1]} : vector<2x128xf32> to vector<2x32xf32>
    %176 = math.tanh %175 : vector<2x32xf32>
    %177 = vector.extract_strided_slice %162 {offsets = [0, 96], sizes = [2, 32], strides = [1, 1]} : vector<2x128xf32> to vector<2x32xf32>
    %178 = arith.negf %177 : vector<2x32xf32>
    %179 = math.exp %178 : vector<2x32xf32>
    %cst_43 = arith.constant 1.000000e+00 : f32
    %180 = vector.broadcast %cst_43 : f32 to vector<2x32xf32>
    %181 = arith.addf %180, %179 : vector<2x32xf32>
    %182 = arith.divf %180, %181 : vector<2x32xf32>
    %183 = arith.mulf %174, %127 : vector<2x32xf32>
    %184 = arith.mulf %168, %176 : vector<2x32xf32>
    %185 = arith.addf %183, %184 : vector<2x32xf32>
    %186 = math.tanh %185 : vector<2x32xf32>
    %187 = arith.mulf %182, %186 : vector<2x32xf32>
    %188 = vector.extract_strided_slice %5 {offsets = [6, 0], sizes = [2, 128], strides = [1, 1]} : vector<16x128xf32> to vector<2x128xf32>
    %cst_44 = arith.constant dense<0.000000e+00> : vector<2x128xf32>
    %189 = tpu.matmul %157, %6, %cst_44 {dimension_numbers = #tpu.dot_dimension_numbers<[1], [0], [0], [1], [0, 0, 1, 1], [], []>} : vector<2x32xf32>, vector<32x128xf32>, vector<2x128xf32> -> vector<2x128xf32>
    %190 = arith.addf %188, %189 : vector<2x128xf32>
    %191 = vector.extract_strided_slice %190 {offsets = [0, 0], sizes = [2, 32], strides = [1, 1]} : vector<2x128xf32> to vector<2x32xf32>
    %192 = arith.negf %191 : vector<2x32xf32>
    %193 = math.exp %192 : vector<2x32xf32>
    %cst_45 = arith.constant 1.000000e+00 : f32
    %194 = vector.broadcast %cst_45 : f32 to vector<2x32xf32>
    %195 = arith.addf %194, %193 : vector<2x32xf32>
    %196 = arith.divf %194, %195 : vector<2x32xf32>
    %197 = vector.extract_strided_slice %190 {offsets = [0, 32], sizes = [2, 32], strides = [1, 1]} : vector<2x128xf32> to vector<2x32xf32>
    %198 = arith.negf %197 : vector<2x32xf32>
    %199 = math.exp %198 : vector<2x32xf32>
    %cst_46 = arith.constant 1.000000e+00 : f32
    %200 = vector.broadcast %cst_46 : f32 to vector<2x32xf32>
    %201 = arith.addf %200, %199 : vector<2x32xf32>
    %202 = arith.divf %200, %201 : vector<2x32xf32>
    %203 = vector.extract_strided_slice %190 {offsets = [0, 64], sizes = [2, 32], strides = [1, 1]} : vector<2x128xf32> to vector<2x32xf32>
    %204 = math.tanh %203 : vector<2x32xf32>
    %205 = vector.extract_strided_slice %190 {offsets = [0, 96], sizes = [2, 32], strides = [1, 1]} : vector<2x128xf32> to vector<2x32xf32>
    %206 = arith.negf %205 : vector<2x32xf32>
    %207 = math.exp %206 : vector<2x32xf32>
    %cst_47 = arith.constant 1.000000e+00 : f32
    %208 = vector.broadcast %cst_47 : f32 to vector<2x32xf32>
    %209 = arith.addf %208, %207 : vector<2x32xf32>
    %210 = arith.divf %208, %209 : vector<2x32xf32>
    %211 = arith.mulf %202, %155 : vector<2x32xf32>
    %212 = arith.mulf %196, %204 : vector<2x32xf32>
    %213 = arith.addf %211, %212 : vector<2x32xf32>
    %214 = math.tanh %213 : vector<2x32xf32>
    %215 = arith.mulf %210, %214 : vector<2x32xf32>
    %cst_48 = arith.constant dense<0.000000e+00> : vector<2x128xf32>
    %216 = tpu.matmul %215, %7, %cst_48 {dimension_numbers = #tpu.dot_dimension_numbers<[1], [0], [0], [1], [0, 0, 1, 1], [], []>} : vector<2x32xf32>, vector<32x128xf32>, vector<2x128xf32> -> vector<2x128xf32>
    %cst_49 = arith.constant dense<0.000000e+00> : vector<2x128xf32>
    %217 = tpu.matmul %187, %8, %cst_49 {dimension_numbers = #tpu.dot_dimension_numbers<[1], [0], [0], [1], [0, 0, 1, 1], [], []>} : vector<2x32xf32>, vector<32x128xf32>, vector<2x128xf32> -> vector<2x128xf32>
    %218 = arith.addf %216, %217 : vector<2x128xf32>
    %219 = vector.broadcast %9 : vector<1x128xf32> to vector<2x128xf32>
    %220 = arith.addf %218, %219 : vector<2x128xf32>
    %221 = vector.extract_strided_slice %220 {offsets = [0, 0], sizes = [2, 32], strides = [1, 1]} : vector<2x128xf32> to vector<2x32xf32>
    %222 = arith.negf %221 : vector<2x32xf32>
    %223 = math.exp %222 : vector<2x32xf32>
    %cst_50 = arith.constant 1.000000e+00 : f32
    %224 = vector.broadcast %cst_50 : f32 to vector<2x32xf32>
    %225 = arith.addf %224, %223 : vector<2x32xf32>
    %226 = arith.divf %224, %225 : vector<2x32xf32>
    %227 = vector.extract_strided_slice %220 {offsets = [0, 32], sizes = [2, 32], strides = [1, 1]} : vector<2x128xf32> to vector<2x32xf32>
    %228 = arith.negf %227 : vector<2x32xf32>
    %229 = math.exp %228 : vector<2x32xf32>
    %cst_51 = arith.constant 1.000000e+00 : f32
    %230 = vector.broadcast %cst_51 : f32 to vector<2x32xf32>
    %231 = arith.addf %230, %229 : vector<2x32xf32>
    %232 = arith.divf %230, %231 : vector<2x32xf32>
    %233 = vector.extract_strided_slice %220 {offsets = [0, 64], sizes = [2, 32], strides = [1, 1]} : vector<2x128xf32> to vector<2x32xf32>
    %234 = math.tanh %233 : vector<2x32xf32>
    %235 = vector.extract_strided_slice %220 {offsets = [0, 96], sizes = [2, 32], strides = [1, 1]} : vector<2x128xf32> to vector<2x32xf32>
    %236 = arith.negf %235 : vector<2x32xf32>
    %237 = math.exp %236 : vector<2x32xf32>
    %cst_52 = arith.constant 1.000000e+00 : f32
    %238 = vector.broadcast %cst_52 : f32 to vector<2x32xf32>
    %239 = arith.addf %238, %237 : vector<2x32xf32>
    %240 = arith.divf %238, %239 : vector<2x32xf32>
    %241 = arith.mulf %232, %185 : vector<2x32xf32>
    %242 = arith.mulf %226, %234 : vector<2x32xf32>
    %243 = arith.addf %241, %242 : vector<2x32xf32>
    %244 = math.tanh %243 : vector<2x32xf32>
    %245 = arith.mulf %240, %244 : vector<2x32xf32>
    %246 = vector.extract_strided_slice %5 {offsets = [8, 0], sizes = [2, 128], strides = [1, 1]} : vector<16x128xf32> to vector<2x128xf32>
    %cst_53 = arith.constant dense<0.000000e+00> : vector<2x128xf32>
    %247 = tpu.matmul %215, %6, %cst_53 {dimension_numbers = #tpu.dot_dimension_numbers<[1], [0], [0], [1], [0, 0, 1, 1], [], []>} : vector<2x32xf32>, vector<32x128xf32>, vector<2x128xf32> -> vector<2x128xf32>
    %248 = arith.addf %246, %247 : vector<2x128xf32>
    %249 = vector.extract_strided_slice %248 {offsets = [0, 0], sizes = [2, 32], strides = [1, 1]} : vector<2x128xf32> to vector<2x32xf32>
    %250 = arith.negf %249 : vector<2x32xf32>
    %251 = math.exp %250 : vector<2x32xf32>
    %cst_54 = arith.constant 1.000000e+00 : f32
    %252 = vector.broadcast %cst_54 : f32 to vector<2x32xf32>
    %253 = arith.addf %252, %251 : vector<2x32xf32>
    %254 = arith.divf %252, %253 : vector<2x32xf32>
    %255 = vector.extract_strided_slice %248 {offsets = [0, 32], sizes = [2, 32], strides = [1, 1]} : vector<2x128xf32> to vector<2x32xf32>
    %256 = arith.negf %255 : vector<2x32xf32>
    %257 = math.exp %256 : vector<2x32xf32>
    %cst_55 = arith.constant 1.000000e+00 : f32
    %258 = vector.broadcast %cst_55 : f32 to vector<2x32xf32>
    %259 = arith.addf %258, %257 : vector<2x32xf32>
    %260 = arith.divf %258, %259 : vector<2x32xf32>
    %261 = vector.extract_strided_slice %248 {offsets = [0, 64], sizes = [2, 32], strides = [1, 1]} : vector<2x128xf32> to vector<2x32xf32>
    %262 = math.tanh %261 : vector<2x32xf32>
    %263 = vector.extract_strided_slice %248 {offsets = [0, 96], sizes = [2, 32], strides = [1, 1]} : vector<2x128xf32> to vector<2x32xf32>
    %264 = arith.negf %263 : vector<2x32xf32>
    %265 = math.exp %264 : vector<2x32xf32>
    %cst_56 = arith.constant 1.000000e+00 : f32
    %266 = vector.broadcast %cst_56 : f32 to vector<2x32xf32>
    %267 = arith.addf %266, %265 : vector<2x32xf32>
    %268 = arith.divf %266, %267 : vector<2x32xf32>
    %269 = arith.mulf %260, %213 : vector<2x32xf32>
    %270 = arith.mulf %254, %262 : vector<2x32xf32>
    %271 = arith.addf %269, %270 : vector<2x32xf32>
    %272 = math.tanh %271 : vector<2x32xf32>
    %273 = arith.mulf %268, %272 : vector<2x32xf32>
    %cst_57 = arith.constant dense<0.000000e+00> : vector<2x128xf32>
    %274 = tpu.matmul %273, %7, %cst_57 {dimension_numbers = #tpu.dot_dimension_numbers<[1], [0], [0], [1], [0, 0, 1, 1], [], []>} : vector<2x32xf32>, vector<32x128xf32>, vector<2x128xf32> -> vector<2x128xf32>
    %cst_58 = arith.constant dense<0.000000e+00> : vector<2x128xf32>
    %275 = tpu.matmul %245, %8, %cst_58 {dimension_numbers = #tpu.dot_dimension_numbers<[1], [0], [0], [1], [0, 0, 1, 1], [], []>} : vector<2x32xf32>, vector<32x128xf32>, vector<2x128xf32> -> vector<2x128xf32>
    %276 = arith.addf %274, %275 : vector<2x128xf32>
    %277 = vector.broadcast %9 : vector<1x128xf32> to vector<2x128xf32>
    %278 = arith.addf %276, %277 : vector<2x128xf32>
    %279 = vector.extract_strided_slice %278 {offsets = [0, 0], sizes = [2, 32], strides = [1, 1]} : vector<2x128xf32> to vector<2x32xf32>
    %280 = arith.negf %279 : vector<2x32xf32>
    %281 = math.exp %280 : vector<2x32xf32>
    %cst_59 = arith.constant 1.000000e+00 : f32
    %282 = vector.broadcast %cst_59 : f32 to vector<2x32xf32>
    %283 = arith.addf %282, %281 : vector<2x32xf32>
    %284 = arith.divf %282, %283 : vector<2x32xf32>
    %285 = vector.extract_strided_slice %278 {offsets = [0, 32], sizes = [2, 32], strides = [1, 1]} : vector<2x128xf32> to vector<2x32xf32>
    %286 = arith.negf %285 : vector<2x32xf32>
    %287 = math.exp %286 : vector<2x32xf32>
    %cst_60 = arith.constant 1.000000e+00 : f32
    %288 = vector.broadcast %cst_60 : f32 to vector<2x32xf32>
    %289 = arith.addf %288, %287 : vector<2x32xf32>
    %290 = arith.divf %288, %289 : vector<2x32xf32>
    %291 = vector.extract_strided_slice %278 {offsets = [0, 64], sizes = [2, 32], strides = [1, 1]} : vector<2x128xf32> to vector<2x32xf32>
    %292 = math.tanh %291 : vector<2x32xf32>
    %293 = vector.extract_strided_slice %278 {offsets = [0, 96], sizes = [2, 32], strides = [1, 1]} : vector<2x128xf32> to vector<2x32xf32>
    %294 = arith.negf %293 : vector<2x32xf32>
    %295 = math.exp %294 : vector<2x32xf32>
    %cst_61 = arith.constant 1.000000e+00 : f32
    %296 = vector.broadcast %cst_61 : f32 to vector<2x32xf32>
    %297 = arith.addf %296, %295 : vector<2x32xf32>
    %298 = arith.divf %296, %297 : vector<2x32xf32>
    %299 = arith.mulf %290, %243 : vector<2x32xf32>
    %300 = arith.mulf %284, %292 : vector<2x32xf32>
    %301 = arith.addf %299, %300 : vector<2x32xf32>
    %302 = math.tanh %301 : vector<2x32xf32>
    %303 = arith.mulf %298, %302 : vector<2x32xf32>
    %304 = vector.extract_strided_slice %5 {offsets = [10, 0], sizes = [2, 128], strides = [1, 1]} : vector<16x128xf32> to vector<2x128xf32>
    %cst_62 = arith.constant dense<0.000000e+00> : vector<2x128xf32>
    %305 = tpu.matmul %273, %6, %cst_62 {dimension_numbers = #tpu.dot_dimension_numbers<[1], [0], [0], [1], [0, 0, 1, 1], [], []>} : vector<2x32xf32>, vector<32x128xf32>, vector<2x128xf32> -> vector<2x128xf32>
    %306 = arith.addf %304, %305 : vector<2x128xf32>
    %307 = vector.extract_strided_slice %306 {offsets = [0, 0], sizes = [2, 32], strides = [1, 1]} : vector<2x128xf32> to vector<2x32xf32>
    %308 = arith.negf %307 : vector<2x32xf32>
    %309 = math.exp %308 : vector<2x32xf32>
    %cst_63 = arith.constant 1.000000e+00 : f32
    %310 = vector.broadcast %cst_63 : f32 to vector<2x32xf32>
    %311 = arith.addf %310, %309 : vector<2x32xf32>
    %312 = arith.divf %310, %311 : vector<2x32xf32>
    %313 = vector.extract_strided_slice %306 {offsets = [0, 32], sizes = [2, 32], strides = [1, 1]} : vector<2x128xf32> to vector<2x32xf32>
    %314 = arith.negf %313 : vector<2x32xf32>
    %315 = math.exp %314 : vector<2x32xf32>
    %cst_64 = arith.constant 1.000000e+00 : f32
    %316 = vector.broadcast %cst_64 : f32 to vector<2x32xf32>
    %317 = arith.addf %316, %315 : vector<2x32xf32>
    %318 = arith.divf %316, %317 : vector<2x32xf32>
    %319 = vector.extract_strided_slice %306 {offsets = [0, 64], sizes = [2, 32], strides = [1, 1]} : vector<2x128xf32> to vector<2x32xf32>
    %320 = math.tanh %319 : vector<2x32xf32>
    %321 = vector.extract_strided_slice %306 {offsets = [0, 96], sizes = [2, 32], strides = [1, 1]} : vector<2x128xf32> to vector<2x32xf32>
    %322 = arith.negf %321 : vector<2x32xf32>
    %323 = math.exp %322 : vector<2x32xf32>
    %cst_65 = arith.constant 1.000000e+00 : f32
    %324 = vector.broadcast %cst_65 : f32 to vector<2x32xf32>
    %325 = arith.addf %324, %323 : vector<2x32xf32>
    %326 = arith.divf %324, %325 : vector<2x32xf32>
    %327 = arith.mulf %318, %271 : vector<2x32xf32>
    %328 = arith.mulf %312, %320 : vector<2x32xf32>
    %329 = arith.addf %327, %328 : vector<2x32xf32>
    %330 = math.tanh %329 : vector<2x32xf32>
    %331 = arith.mulf %326, %330 : vector<2x32xf32>
    %cst_66 = arith.constant dense<0.000000e+00> : vector<2x128xf32>
    %332 = tpu.matmul %331, %7, %cst_66 {dimension_numbers = #tpu.dot_dimension_numbers<[1], [0], [0], [1], [0, 0, 1, 1], [], []>} : vector<2x32xf32>, vector<32x128xf32>, vector<2x128xf32> -> vector<2x128xf32>
    %cst_67 = arith.constant dense<0.000000e+00> : vector<2x128xf32>
    %333 = tpu.matmul %303, %8, %cst_67 {dimension_numbers = #tpu.dot_dimension_numbers<[1], [0], [0], [1], [0, 0, 1, 1], [], []>} : vector<2x32xf32>, vector<32x128xf32>, vector<2x128xf32> -> vector<2x128xf32>
    %334 = arith.addf %332, %333 : vector<2x128xf32>
    %335 = vector.broadcast %9 : vector<1x128xf32> to vector<2x128xf32>
    %336 = arith.addf %334, %335 : vector<2x128xf32>
    %337 = vector.extract_strided_slice %336 {offsets = [0, 0], sizes = [2, 32], strides = [1, 1]} : vector<2x128xf32> to vector<2x32xf32>
    %338 = arith.negf %337 : vector<2x32xf32>
    %339 = math.exp %338 : vector<2x32xf32>
    %cst_68 = arith.constant 1.000000e+00 : f32
    %340 = vector.broadcast %cst_68 : f32 to vector<2x32xf32>
    %341 = arith.addf %340, %339 : vector<2x32xf32>
    %342 = arith.divf %340, %341 : vector<2x32xf32>
    %343 = vector.extract_strided_slice %336 {offsets = [0, 32], sizes = [2, 32], strides = [1, 1]} : vector<2x128xf32> to vector<2x32xf32>
    %344 = arith.negf %343 : vector<2x32xf32>
    %345 = math.exp %344 : vector<2x32xf32>
    %cst_69 = arith.constant 1.000000e+00 : f32
    %346 = vector.broadcast %cst_69 : f32 to vector<2x32xf32>
    %347 = arith.addf %346, %345 : vector<2x32xf32>
    %348 = arith.divf %346, %347 : vector<2x32xf32>
    %349 = vector.extract_strided_slice %336 {offsets = [0, 64], sizes = [2, 32], strides = [1, 1]} : vector<2x128xf32> to vector<2x32xf32>
    %350 = math.tanh %349 : vector<2x32xf32>
    %351 = vector.extract_strided_slice %336 {offsets = [0, 96], sizes = [2, 32], strides = [1, 1]} : vector<2x128xf32> to vector<2x32xf32>
    %352 = arith.negf %351 : vector<2x32xf32>
    %353 = math.exp %352 : vector<2x32xf32>
    %cst_70 = arith.constant 1.000000e+00 : f32
    %354 = vector.broadcast %cst_70 : f32 to vector<2x32xf32>
    %355 = arith.addf %354, %353 : vector<2x32xf32>
    %356 = arith.divf %354, %355 : vector<2x32xf32>
    %357 = arith.mulf %348, %301 : vector<2x32xf32>
    %358 = arith.mulf %342, %350 : vector<2x32xf32>
    %359 = arith.addf %357, %358 : vector<2x32xf32>
    %360 = math.tanh %359 : vector<2x32xf32>
    %361 = arith.mulf %356, %360 : vector<2x32xf32>
    %362 = vector.extract_strided_slice %5 {offsets = [12, 0], sizes = [2, 128], strides = [1, 1]} : vector<16x128xf32> to vector<2x128xf32>
    %cst_71 = arith.constant dense<0.000000e+00> : vector<2x128xf32>
    %363 = tpu.matmul %331, %6, %cst_71 {dimension_numbers = #tpu.dot_dimension_numbers<[1], [0], [0], [1], [0, 0, 1, 1], [], []>} : vector<2x32xf32>, vector<32x128xf32>, vector<2x128xf32> -> vector<2x128xf32>
    %364 = arith.addf %362, %363 : vector<2x128xf32>
    %365 = vector.extract_strided_slice %364 {offsets = [0, 0], sizes = [2, 32], strides = [1, 1]} : vector<2x128xf32> to vector<2x32xf32>
    %366 = arith.negf %365 : vector<2x32xf32>
    %367 = math.exp %366 : vector<2x32xf32>
    %cst_72 = arith.constant 1.000000e+00 : f32
    %368 = vector.broadcast %cst_72 : f32 to vector<2x32xf32>
    %369 = arith.addf %368, %367 : vector<2x32xf32>
    %370 = arith.divf %368, %369 : vector<2x32xf32>
    %371 = vector.extract_strided_slice %364 {offsets = [0, 32], sizes = [2, 32], strides = [1, 1]} : vector<2x128xf32> to vector<2x32xf32>
    %372 = arith.negf %371 : vector<2x32xf32>
    %373 = math.exp %372 : vector<2x32xf32>
    %cst_73 = arith.constant 1.000000e+00 : f32
    %374 = vector.broadcast %cst_73 : f32 to vector<2x32xf32>
    %375 = arith.addf %374, %373 : vector<2x32xf32>
    %376 = arith.divf %374, %375 : vector<2x32xf32>
    %377 = vector.extract_strided_slice %364 {offsets = [0, 64], sizes = [2, 32], strides = [1, 1]} : vector<2x128xf32> to vector<2x32xf32>
    %378 = math.tanh %377 : vector<2x32xf32>
    %379 = vector.extract_strided_slice %364 {offsets = [0, 96], sizes = [2, 32], strides = [1, 1]} : vector<2x128xf32> to vector<2x32xf32>
    %380 = arith.negf %379 : vector<2x32xf32>
    %381 = math.exp %380 : vector<2x32xf32>
    %cst_74 = arith.constant 1.000000e+00 : f32
    %382 = vector.broadcast %cst_74 : f32 to vector<2x32xf32>
    %383 = arith.addf %382, %381 : vector<2x32xf32>
    %384 = arith.divf %382, %383 : vector<2x32xf32>
    %385 = arith.mulf %376, %329 : vector<2x32xf32>
    %386 = arith.mulf %370, %378 : vector<2x32xf32>
    %387 = arith.addf %385, %386 : vector<2x32xf32>
    %388 = math.tanh %387 : vector<2x32xf32>
    %389 = arith.mulf %384, %388 : vector<2x32xf32>
    %cst_75 = arith.constant dense<0.000000e+00> : vector<2x128xf32>
    %390 = tpu.matmul %389, %7, %cst_75 {dimension_numbers = #tpu.dot_dimension_numbers<[1], [0], [0], [1], [0, 0, 1, 1], [], []>} : vector<2x32xf32>, vector<32x128xf32>, vector<2x128xf32> -> vector<2x128xf32>
    %cst_76 = arith.constant dense<0.000000e+00> : vector<2x128xf32>
    %391 = tpu.matmul %361, %8, %cst_76 {dimension_numbers = #tpu.dot_dimension_numbers<[1], [0], [0], [1], [0, 0, 1, 1], [], []>} : vector<2x32xf32>, vector<32x128xf32>, vector<2x128xf32> -> vector<2x128xf32>
    %392 = arith.addf %390, %391 : vector<2x128xf32>
    %393 = vector.broadcast %9 : vector<1x128xf32> to vector<2x128xf32>
    %394 = arith.addf %392, %393 : vector<2x128xf32>
    %395 = vector.extract_strided_slice %394 {offsets = [0, 0], sizes = [2, 32], strides = [1, 1]} : vector<2x128xf32> to vector<2x32xf32>
    %396 = arith.negf %395 : vector<2x32xf32>
    %397 = math.exp %396 : vector<2x32xf32>
    %cst_77 = arith.constant 1.000000e+00 : f32
    %398 = vector.broadcast %cst_77 : f32 to vector<2x32xf32>
    %399 = arith.addf %398, %397 : vector<2x32xf32>
    %400 = arith.divf %398, %399 : vector<2x32xf32>
    %401 = vector.extract_strided_slice %394 {offsets = [0, 32], sizes = [2, 32], strides = [1, 1]} : vector<2x128xf32> to vector<2x32xf32>
    %402 = arith.negf %401 : vector<2x32xf32>
    %403 = math.exp %402 : vector<2x32xf32>
    %cst_78 = arith.constant 1.000000e+00 : f32
    %404 = vector.broadcast %cst_78 : f32 to vector<2x32xf32>
    %405 = arith.addf %404, %403 : vector<2x32xf32>
    %406 = arith.divf %404, %405 : vector<2x32xf32>
    %407 = vector.extract_strided_slice %394 {offsets = [0, 64], sizes = [2, 32], strides = [1, 1]} : vector<2x128xf32> to vector<2x32xf32>
    %408 = math.tanh %407 : vector<2x32xf32>
    %409 = vector.extract_strided_slice %394 {offsets = [0, 96], sizes = [2, 32], strides = [1, 1]} : vector<2x128xf32> to vector<2x32xf32>
    %410 = arith.negf %409 : vector<2x32xf32>
    %411 = math.exp %410 : vector<2x32xf32>
    %cst_79 = arith.constant 1.000000e+00 : f32
    %412 = vector.broadcast %cst_79 : f32 to vector<2x32xf32>
    %413 = arith.addf %412, %411 : vector<2x32xf32>
    %414 = arith.divf %412, %413 : vector<2x32xf32>
    %415 = arith.mulf %406, %359 : vector<2x32xf32>
    %416 = arith.mulf %400, %408 : vector<2x32xf32>
    %417 = arith.addf %415, %416 : vector<2x32xf32>
    %418 = math.tanh %417 : vector<2x32xf32>
    %419 = arith.mulf %414, %418 : vector<2x32xf32>
    %420 = vector.extract_strided_slice %5 {offsets = [14, 0], sizes = [2, 128], strides = [1, 1]} : vector<16x128xf32> to vector<2x128xf32>
    %cst_80 = arith.constant dense<0.000000e+00> : vector<2x128xf32>
    %421 = tpu.matmul %389, %6, %cst_80 {dimension_numbers = #tpu.dot_dimension_numbers<[1], [0], [0], [1], [0, 0, 1, 1], [], []>} : vector<2x32xf32>, vector<32x128xf32>, vector<2x128xf32> -> vector<2x128xf32>
    %422 = arith.addf %420, %421 : vector<2x128xf32>
    %423 = vector.extract_strided_slice %422 {offsets = [0, 0], sizes = [2, 32], strides = [1, 1]} : vector<2x128xf32> to vector<2x32xf32>
    %424 = arith.negf %423 : vector<2x32xf32>
    %425 = math.exp %424 : vector<2x32xf32>
    %cst_81 = arith.constant 1.000000e+00 : f32
    %426 = vector.broadcast %cst_81 : f32 to vector<2x32xf32>
    %427 = arith.addf %426, %425 : vector<2x32xf32>
    %428 = arith.divf %426, %427 : vector<2x32xf32>
    %429 = vector.extract_strided_slice %422 {offsets = [0, 32], sizes = [2, 32], strides = [1, 1]} : vector<2x128xf32> to vector<2x32xf32>
    %430 = arith.negf %429 : vector<2x32xf32>
    %431 = math.exp %430 : vector<2x32xf32>
    %cst_82 = arith.constant 1.000000e+00 : f32
    %432 = vector.broadcast %cst_82 : f32 to vector<2x32xf32>
    %433 = arith.addf %432, %431 : vector<2x32xf32>
    %434 = arith.divf %432, %433 : vector<2x32xf32>
    %435 = vector.extract_strided_slice %422 {offsets = [0, 64], sizes = [2, 32], strides = [1, 1]} : vector<2x128xf32> to vector<2x32xf32>
    %436 = math.tanh %435 : vector<2x32xf32>
    %437 = vector.extract_strided_slice %422 {offsets = [0, 96], sizes = [2, 32], strides = [1, 1]} : vector<2x128xf32> to vector<2x32xf32>
    %438 = arith.negf %437 : vector<2x32xf32>
    %439 = math.exp %438 : vector<2x32xf32>
    %cst_83 = arith.constant 1.000000e+00 : f32
    %440 = vector.broadcast %cst_83 : f32 to vector<2x32xf32>
    %441 = arith.addf %440, %439 : vector<2x32xf32>
    %442 = arith.divf %440, %441 : vector<2x32xf32>
    %443 = arith.mulf %434, %387 : vector<2x32xf32>
    %444 = arith.mulf %428, %436 : vector<2x32xf32>
    %445 = arith.addf %443, %444 : vector<2x32xf32>
    %446 = math.tanh %445 : vector<2x32xf32>
    %447 = arith.mulf %442, %446 : vector<2x32xf32>
    %cst_84 = arith.constant dense<0.000000e+00> : vector<2x128xf32>
    %448 = tpu.matmul %447, %7, %cst_84 {dimension_numbers = #tpu.dot_dimension_numbers<[1], [0], [0], [1], [0, 0, 1, 1], [], []>} : vector<2x32xf32>, vector<32x128xf32>, vector<2x128xf32> -> vector<2x128xf32>
    %cst_85 = arith.constant dense<0.000000e+00> : vector<2x128xf32>
    %449 = tpu.matmul %419, %8, %cst_85 {dimension_numbers = #tpu.dot_dimension_numbers<[1], [0], [0], [1], [0, 0, 1, 1], [], []>} : vector<2x32xf32>, vector<32x128xf32>, vector<2x128xf32> -> vector<2x128xf32>
    %450 = arith.addf %448, %449 : vector<2x128xf32>
    %451 = vector.broadcast %9 : vector<1x128xf32> to vector<2x128xf32>
    %452 = arith.addf %450, %451 : vector<2x128xf32>
    %453 = vector.extract_strided_slice %452 {offsets = [0, 0], sizes = [2, 32], strides = [1, 1]} : vector<2x128xf32> to vector<2x32xf32>
    %454 = arith.negf %453 : vector<2x32xf32>
    %455 = math.exp %454 : vector<2x32xf32>
    %cst_86 = arith.constant 1.000000e+00 : f32
    %456 = vector.broadcast %cst_86 : f32 to vector<2x32xf32>
    %457 = arith.addf %456, %455 : vector<2x32xf32>
    %458 = arith.divf %456, %457 : vector<2x32xf32>
    %459 = vector.extract_strided_slice %452 {offsets = [0, 32], sizes = [2, 32], strides = [1, 1]} : vector<2x128xf32> to vector<2x32xf32>
    %460 = arith.negf %459 : vector<2x32xf32>
    %461 = math.exp %460 : vector<2x32xf32>
    %cst_87 = arith.constant 1.000000e+00 : f32
    %462 = vector.broadcast %cst_87 : f32 to vector<2x32xf32>
    %463 = arith.addf %462, %461 : vector<2x32xf32>
    %464 = arith.divf %462, %463 : vector<2x32xf32>
    %465 = vector.extract_strided_slice %452 {offsets = [0, 64], sizes = [2, 32], strides = [1, 1]} : vector<2x128xf32> to vector<2x32xf32>
    %466 = math.tanh %465 : vector<2x32xf32>
    %467 = vector.extract_strided_slice %452 {offsets = [0, 96], sizes = [2, 32], strides = [1, 1]} : vector<2x128xf32> to vector<2x32xf32>
    %468 = arith.negf %467 : vector<2x32xf32>
    %469 = math.exp %468 : vector<2x32xf32>
    %cst_88 = arith.constant 1.000000e+00 : f32
    %470 = vector.broadcast %cst_88 : f32 to vector<2x32xf32>
    %471 = arith.addf %470, %469 : vector<2x32xf32>
    %472 = arith.divf %470, %471 : vector<2x32xf32>
    %473 = arith.mulf %464, %417 : vector<2x32xf32>
    %474 = arith.mulf %458, %466 : vector<2x32xf32>
    %475 = arith.addf %473, %474 : vector<2x32xf32>
    %476 = math.tanh %475 : vector<2x32xf32>
    %477 = arith.mulf %472, %476 : vector<2x32xf32>
    %c0_89 = arith.constant 0 : index
    %c0_90 = arith.constant 0 : index
    %478 = vector.load %arg7[%c0_89, %c0_90] : memref<32x1xf32, #tpu.memory_space<vmem>>, vector<32x1xf32>
    %cst_91 = arith.constant dense<0.000000e+00> : vector<2x1xf32>
    %479 = tpu.matmul %477, %478, %cst_91 {dimension_numbers = #tpu.dot_dimension_numbers<[1], [0], [0], [1], [0, 0, 1, 1], [], []>} : vector<2x32xf32>, vector<32x1xf32>, vector<2x1xf32> -> vector<2x1xf32>
    %c0_92 = arith.constant 0 : index
    %c0_93 = arith.constant 0 : index
    %480 = vector.load %arg8[%c0_92, %c0_93] : memref<1x1xf32, #tpu.memory_space<vmem>>, vector<1x1xf32>
    %481 = vector.broadcast %480 : vector<1x1xf32> to vector<2x1xf32>
    %482 = arith.addf %479, %481 : vector<2x1xf32>
    %c0_94 = arith.constant 0 : index
    %c0_95 = arith.constant 0 : index
    %483 = vector.load %arg9[%c0_94, %c0_95] : memref<2x1xf32, #tpu.memory_space<vmem>>, vector<2x1xf32>
    tpu.vector_store %arg9[%c0_94, %c0_95], %482 {strides = array<i32>} : memref<2x1xf32, #tpu.memory_space<vmem>>, vector<2x1xf32>,
    return
  }
}

</mosaic_0001>

<llo_original>
// kernel: lstm_predictor_forward.1
$region0: #{lstm_predictor_forward.1}
  #allocation0 [shape = 'u32[]', space=smem, size = 0x4, offset = 0x4, fixed_abs, tag = 'smem constant byte address 0x4 - core index']
  #allocation1 [shape = 'u32[144,128]{1,0:T(1,128)}', space=vmem, size = 0x12000, scoped, tag = 'internal scratch']
  #allocation2 [shape = 'f32[1,1]{1,0:T(1,128)S(1)}', space=vmem, size = 0x200, scoped, tag = 'scoped memory for lstm_predictor_forward.1']
  %s0 = inlined_call_operand.vmem [shape: f32[16,4], index: 0, kind: input, shape index: {}]
  %s1 = inlined_call_operand.hbm [shape: f32[4,128], index: 1, kind: input, shape index: {}]
  %s2 = inlined_call_operand.vmem [shape: f32[32,128], index: 2, kind: input, shape index: {}]
  %s3 = inlined_call_operand.vmem [shape: f32[1,128], index: 3, kind: input, shape index: {}]
  %s4 = inlined_call_operand.vmem [shape: f32[32,128], index: 4, kind: input, shape index: {}]
  %s5 = inlined_call_operand.hbm [shape: f32[32,128], index: 5, kind: input, shape index: {}]
  %s6 = inlined_call_operand.vmem [shape: f32[1,128], index: 6, kind: input, shape index: {}]
  %s7 = inlined_call_operand.vmem [shape: f32[32,1], index: 7, kind: input, shape index: {}]
  %s8 = inlined_call_operand.<no memory space> [shape: f32[1,1], index: 8, kind: input, shape index: {}]
  %s9 = inlined_call_operand.vmem [shape: f32[2,1], index: 9, kind: output, shape index: {}]
  %s10 = sld [smem:[#allocation0]]
  $region54: #{lstm_predictor_forward.1} parent=0
    _
  %s12 = ssub.s32 1, %s10
  %s13 = scalar_select 0, %s12, %s10
  %v14 = vstv %s8
  %15 = vst [vmem:[#allocation2] sm:$0x1] %v14
  $region1: #{lstm_predictor_forward.1} parent=0
    #allocation3 [shape = 'u8[2048]{0}', space=vmem, size = 0x800, scoped, tag = 'input window, operand 1, single buffered']
    #allocation4 [shape = 's32[1]{0}', space=sflag, size = 0x4, scoped, tag = 'scoped memory for lstm_predictor_forward.1']
    #allocation5 [shape = 'u8[16384]{0}', space=vmem, size = 0x4000, scoped, tag = 'input window, operand 5, single buffered']
    #allocation6 [shape = 's32[1]{0}', space=sflag, size = 0x4, scoped, tag = 'scoped memory for lstm_predictor_forward.1']
    %16 = vsyncpa [#allocation4], 0
    %17 = vsyncpa [#allocation6], 0
    // Predicated region
    $region2: #{lstm_predictor_forward.1} parent=1 // pred_check
      _
    $region3: #{lstm_predictor_forward.1} parent=1 // pred_check_branch
      %19 = sbr.rel (0) target = $region5
    $region4: #{lstm_predictor_forward.1} parent=1 // pred_region
      _
    $region5: #{lstm_predictor_forward.1} parent=1 // pred_fallthru
      _
    // Predicated region
    $region6: #{lstm_predictor_forward.1} parent=1 // pred_check
      _
    $region7: #{lstm_predictor_forward.1} parent=1 // pred_check_branch
      %21 = sbr.rel (0) target = $region9
    $region8: #{lstm_predictor_forward.1} parent=1 // pred_region
      %s23 = ssub.s32 64, 64
      %24 = vsyncadd [#allocation4], %s23
      %s26 = sshll.u32 [#allocation3], 4
      %s27 = int_to_ptr.vmem [resolvable:$true] %s26
      %29 = dma.hbm_to_vmem [thread:$0]  %s1, 64, %s27, [#allocation4]
    $region9: #{lstm_predictor_forward.1} parent=1 // pred_fallthru
      _
    // Predicated region
    $region10: #{lstm_predictor_forward.1} parent=1 // pred_check
      _
    $region11: #{lstm_predictor_forward.1} parent=1 // pred_check_branch
      %31 = sbr.rel (0) target = $region13
    $region12: #{lstm_predictor_forward.1} parent=1 // pred_region
      _
    $region13: #{lstm_predictor_forward.1} parent=1 // pred_fallthru
      _
    // Predicated region
    $region14: #{lstm_predictor_forward.1} parent=1 // pred_check
      _
    $region15: #{lstm_predictor_forward.1} parent=1 // pred_check_branch
      %33 = sbr.rel (0) target = $region17
    $region16: #{lstm_predictor_forward.1} parent=1 // pred_region
      _
    $region17: #{lstm_predictor_forward.1} parent=1 // pred_fallthru
      _
    // Predicated region
    $region18: #{lstm_predictor_forward.1} parent=1 // pred_check
      _
    $region19: #{lstm_predictor_forward.1} parent=1 // pred_check_branch
      %35 = sbr.rel (0) target = $region21
    $region20: #{lstm_predictor_forward.1} parent=1 // pred_region
      _
    $region21: #{lstm_predictor_forward.1} parent=1 // pred_fallthru
      _
    // Predicated region
    $region22: #{lstm_predictor_forward.1} parent=1 // pred_check
      _
    $region23: #{lstm_predictor_forward.1} parent=1 // pred_check_branch
      %37 = sbr.rel (0) target = $region25
    $region24: #{lstm_predictor_forward.1} parent=1 // pred_region
      %s39 = ssub.s32 512, 512
      %40 = vsyncadd [#allocation6], %s39
      %s41 = sshll.u32 [#allocation5], 4
      %s42 = int_to_ptr.vmem [resolvable:$true] %s41
      %47 = dma.hbm_to_vmem [thread:$0]  %s5, 512, %s42, [#allocation6], 128, 128, 8
    $region25: #{lstm_predictor_forward.1} parent=1 // pred_fallthru
      _
    // Predicated region
    $region26: #{lstm_predictor_forward.1} parent=1 // pred_check
      _
    $region27: #{lstm_predictor_forward.1} parent=1 // pred_check_branch
      %49 = sbr.rel (0) target = $region29
    $region28: #{lstm_predictor_forward.1} parent=1 // pred_region
      _
    $region29: #{lstm_predictor_forward.1} parent=1 // pred_fallthru
      _
    // Predicated region
    $region30: #{lstm_predictor_forward.1} parent=1 // pred_check
      _
    $region31: #{lstm_predictor_forward.1} parent=1 // pred_check_branch
      %51 = sbr.rel (0) target = $region33
    $region32: #{lstm_predictor_forward.1} parent=1 // pred_region
      _
    $region33: #{lstm_predictor_forward.1} parent=1 // pred_fallthru
      _
    // Predicated region
    $region34: #{lstm_predictor_forward.1} parent=1 // pred_check
      _
    $region35: #{lstm_predictor_forward.1} parent=1 // pred_check_branch
      %53 = sbr.rel (0) target = $region37
    $region36: #{lstm_predictor_forward.1} parent=1 // pred_region
      _
    $region37: #{lstm_predictor_forward.1} parent=1 // pred_fallthru
      _
    // Predicated region
    $region38: #{lstm_predictor_forward.1} parent=1 // pred_check
      _
    $region39: #{lstm_predictor_forward.1} parent=1 // pred_check_branch
      %55 = sbr.rel (0) target = $region41
    $region40: #{lstm_predictor_forward.1} parent=1 // pred_region
      %56 = dma.done [#allocation4], 64
    $region41: #{lstm_predictor_forward.1} parent=1 // pred_fallthru
      _
    // Predicated region
    $region42: #{lstm_predictor_forward.1} parent=1 // pred_check
      _
    $region43: #{lstm_predictor_forward.1} parent=1 // pred_check_branch
      %58 = sbr.rel (0) target = $region45
    $region44: #{lstm_predictor_forward.1} parent=1 // pred_region
      %59 = dma.done [#allocation6], 512
    $region45: #{lstm_predictor_forward.1} parent=1 // pred_fallthru
      _
    %v60 = vld [vmem:[%s0] sm:$0xff]
    %v61 = vld [vmem:[%s0 + $0x8] sm:$0xff]
    %v62 = vld [vmem:[#allocation3] sm:$0xf]
    %v63 = vld [vmem:[%s3] sm:$0x1]
    %v65 = vlaneseq
    %v66 = vshrl.u32 %v65, 7
    %v67 = vsub.s32 0, %v66
    %v68 = vrot.slane %v63, %v67
    %vm70 = vcmask 31744
    %v72 = vsel %vm70, %v60, 0
    %v75 = vsel %vm70, %v61, 0
    %vm77 = vcmask 1043456
    %v79 = vsel %vm77, %v62, 0
    %81 = vmatprep.subr.mxu0 0.0
    %82 = vmatpush1.msra.mxu0 %v79
    %83 = vmatprep.subr.mxu0 0.0
    %84 = vmatpush1.msra.mxu0 0.0
    %85 = vmatprep.subr.mxu0 0.0
    %86 = vmatpush1.msra.mxu0 0.0
    %87 = vmatprep.subr.mxu0 0.0
    %88 = vmatpush1.msra.mxu0 0.0
    %89 = vmatprep.subr.mxu0 0.0
    %90 = vmatpush1.msra.mxu0 0.0
    %91 = vmatprep.subr.mxu0 0.0
    %92 = vmatpush1.msra.mxu0 0.0
    %93 = vmatprep.subr.mxu0 0.0
    %94 = vmatpush1.msra.mxu0 0.0
    %95 = vmatprep.subr.mxu0 0.0
    %96 = vmatpush1.msra.mxu0 0.0
    %97 = vmatprep.subr.mxu0 0.0
    %98 = vmatpush1.msra.mxu0 0.0
    %99 = vmatprep.subr.mxu0 0.0
    %100 = vmatpush1.msra.mxu0 0.0
    %101 = vmatprep.subr.mxu0 0.0
    %102 = vmatpush1.msra.mxu0 0.0
    %103 = vmatprep.subr.mxu0 0.0
    %104 = vmatpush1.msra.mxu0 0.0
    %105 = vmatprep.subr.mxu0 0.0
    %106 = vmatpush1.msra.mxu0 0.0
    %107 = vmatprep.subr.mxu0 0.0
    %108 = vmatpush1.msra.mxu0 0.0
    %109 = vmatprep.subr.mxu0 0.0
    %110 = vmatpush1.msra.mxu0 0.0
    %111 = vmatprep.subr.mxu0 0.0
    %112 = vmatpush1.msra.mxu0 0.0
    %113 = vmatprep.subr.mxu0 0.0
    %114 = vmatpush1.msra.mxu0 0.0
    %115 = vmatprep.subr.mxu0 0.0
    %116 = vmatpush1.msra.mxu0 0.0
    %117 = vmatprep.subr.mxu0 0.0
    %118 = vmatpush1.msra.mxu0 0.0
    %119 = vmatprep.subr.mxu0 0.0
    %120 = vmatpush1.msra.mxu0 0.0
    %121 = vmatprep.subr.mxu0 0.0
    %122 = vmatpush1.msra.mxu0 0.0
    %123 = vmatprep.subr.mxu0 0.0
    %124 = vmatpush1.msra.mxu0 0.0
    %125 = vmatprep.subr.mxu0 0.0
    %126 = vmatpush1.msra.mxu0 0.0
    %127 = vmatprep.subr.mxu0 0.0
    %128 = vmatpush1.msra.mxu0 0.0
    %129 = vmatprep.subr.mxu0 0.0
    %130 = vmatpush1.msra.mxu0 0.0
    %131 = vmatprep.subr.mxu0 0.0
    %132 = vmatpush1.msra.mxu0 0.0
    %133 = vmatprep.subr.mxu0 0.0
    %134 = vmatpush1.msra.mxu0 0.0
    %135 = vmatprep.subr.mxu0 0.0
    %136 = vmatpush1.msra.mxu0 0.0
    %137 = vmatprep.subr.mxu0 0.0
    %138 = vmatpush1.msra.mxu0 0.0
    %139 = vmatprep.subr.mxu0 0.0
    %140 = vmatpush1.msra.mxu0 0.0
    %141 = vmatprep.subr.mxu0 0.0
    %142 = vmatpush1.msra.mxu0 0.0
    %143 = vmatprep.subr.mxu0 0.0
    %144 = vmatpush1.msra.mxu0 0.0
    %145 = vmatprep.mubr.f32.mxu0 0.0
    %146 = vmatmul.mubr.f32.gmra.mrb[0].mxu0 %v72
    %v147 = vpop.f32.mrb[0].mxu0
    %v148 = vadd.f32 %v68, %v147
    %v149 = vpop.f32.mrb[0].mxu0
    %150 = vmatprep.mubr.f32.mxu0 0.0
    %151 = vmatmul.mubr.f32.gmra.mrb[0].mxu0 %v75
    %v152 = vpop.f32.mrb[0].mxu0
    %v153 = vadd.f32 %v68, %v152
    %v154 = vpop.f32.mrb[0].mxu0
    %155 = vdwg.mxu0
    %v156 = vld [vmem:[%s2] sm:$0xff]
    %v157 = vld [vmem:[%s2 + $0x8] sm:$0xff]
    %v158 = vld [vmem:[%s2 + $0x10] sm:$0xff]
    %v159 = vld [vmem:[%s2 + $0x18] sm:$0xff]
    %v160 = vld [vmem:[%s4] sm:$0xff]
    %v161 = vld [vmem:[%s4 + $0x8] sm:$0xff]
    %v162 = vld [vmem:[%s4 + $0x10] sm:$0xff]
    %v163 = vld [vmem:[%s4 + $0x18] sm:$0xff]
    %v164 = vld [vmem:[#allocation5] sm:$0xff]
    %v165 = vld [vmem:[#allocation5 + $0x8] sm:$0xff]
    %v166 = vld [vmem:[#allocation5 + $0x10] sm:$0xff]
    %v167 = vld [vmem:[#allocation5 + $0x18] sm:$0xff]
    %v168 = vld [vmem:[%s6] sm:$0x1]
    %vm169 = vcmask 261120
    %v171 = vsel %vm169, 0.0, 0
    %173 = vmatprep.subr.mxu0 0.0
    %174 = vmatpush1.msra.mxu0 %v156
    %175 = vmatprep.subr.mxu0 0.0
    %176 = vmatpush1.msra.mxu0 %v157
    %177 = vmatprep.subr.mxu0 0.0
    %178 = vmatpush1.msra.mxu0 %v158
    %179 = vmatprep.subr.mxu0 0.0
    %180 = vmatpush1.msra.mxu0 %v159
    %181 = vmatprep.subr.mxu0 0.0
    %182 = vmatpush1.msra.mxu0 0.0
    %183 = vmatprep.subr.mxu0 0.0
    %184 = vmatpush1.msra.mxu0 0.0
    %185 = vmatprep.subr.mxu0 0.0
    %186 = vmatpush1.msra.mxu0 0.0
    %187 = vmatprep.subr.mxu0 0.0
    %188 = vmatpush1.msra.mxu0 0.0
    %189 = vmatprep.subr.mxu0 0.0
    %190 = vmatpush1.msra.mxu0 0.0
    %191 = vmatprep.subr.mxu0 0.0
    %192 = vmatpush1.msra.mxu0 0.0
    %193 = vmatprep.subr.mxu0 0.0
    %194 = vmatpush1.msra.mxu0 0.0
    %195 = vmatprep.subr.mxu0 0.0
    %196 = vmatpush1.msra.mxu0 0.0
    %197 = vmatprep.subr.mxu0 0.0
    %198 = vmatpush1.msra.mxu0 0.0
    %199 = vmatprep.subr.mxu0 0.0
    %200 = vmatpush1.msra.mxu0 0.0
    %201 = vmatprep.subr.mxu0 0.0
    %202 = vmatpush1.msra.mxu0 0.0
    %203 = vmatprep.subr.mxu0 0.0
    %204 = vmatpush1.msra.mxu0 0.0
    %205 = vmatprep.subr.mxu0 0.0
    %206 = vmatpush1.msra.mxu0 0.0
    %207 = vmatprep.subr.mxu0 0.0
    %208 = vmatpush1.msra.mxu0 0.0
    %209 = vmatprep.subr.mxu0 0.0
    %210 = vmatpush1.msra.mxu0 0.0
    %211 = vmatprep.subr.mxu0 0.0
    %212 = vmatpush1.msra.mxu0 0.0
    %213 = vmatprep.subr.mxu0 0.0
    %214 = vmatpush1.msra.mxu0 0.0
    %215 = vmatprep.subr.mxu0 0.0
    %216 = vmatpush1.msra.mxu0 0.0
    %217 = vmatprep.subr.mxu0 0.0
    %218 = vmatpush1.msra.mxu0 0.0
    %219 = vmatprep.subr.mxu0 0.0
    %220 = vmatpush1.msra.mxu0 0.0
    %221 = vmatprep.subr.mxu0 0.0
    %222 = vmatpush1.msra.mxu0 0.0
    %223 = vmatprep.subr.mxu0 0.0
    %224 = vmatpush1.msra.mxu0 0.0
    %225 = vmatprep.subr.mxu0 0.0
    %226 = vmatpush1.msra.mxu0 0.0
    %227 = vmatprep.subr.mxu0 0.0
    %228 = vmatpush1.msra.mxu0 0.0
    %229 = vmatprep.subr.mxu0 0.0
    %230 = vmatpush1.msra.mxu0 0.0
    %231 = vmatprep.subr.mxu0 0.0
    %232 = vmatpush1.msra.mxu0 0.0
    %233 = vmatprep.subr.mxu0 0.0
    %234 = vmatpush1.msra.mxu0 0.0
    %235 = vmatprep.subr.mxu0 0.0
    %236 = vmatpush1.msra.mxu0 0.0
    %237 = vmatprep.mubr.f32.mxu0 0.0
    %238 = vmatmul.mubr.f32.gmra.mrb[0].mxu0 %v171
    %v239 = vpop.f32.mrb[0].mxu0
    %v240 = vadd.f32 0.0, %v239
    %v241 = vpop.f32.mrb[0].mxu0
    %242 = vdwg.mxu0
    %v243 = vadd.f32 %v148, %v240
    %v244 = vxor.u32 %v243, 2147483648
    %v245 = vmul.f32 %v244, 1.442695
    %v246 = vpow.pop %v245
    %v247 = vadd.f32 %v246, 1.0
    %v248 = vrcp.pop %v247
    %v249 = vmul.f32 1.0, %v248
    %v250 = vtanh.pop %v243
    %v251 = vmul.f32 %v249, 0.0
    %253 = vrot.lane.b32.xlu0 %v250, 64
    %v254 = vpop.permute.xlu0 %253
    %v256 = vmul.f32 %v249, %v254
    %258 = vrot.lane.b32.xlu0 %v256, 32
    %v259 = vpop.permute.xlu0 %258
    %v261 = vadd.f32 %v251, %v259
    %v262 = vtanh.pop %v261
    %264 = vrot.lane.b32.xlu0 %v262, 64
    %v265 = vpop.permute.xlu0 %264
    %v267 = vmul.f32 %v249, %v265
    %268 = vmatprep.subr.mxu0 0.0
    %269 = vmatpush1.msra.mxu0 %v164
    %270 = vmatprep.subr.mxu0 0.0
    %271 = vmatpush1.msra.mxu0 %v165
    %272 = vmatprep.subr.mxu0 0.0
    %273 = vmatpush1.msra.mxu0 %v166
    %274 = vmatprep.subr.mxu0 0.0
    %275 = vmatpush1.msra.mxu0 %v167
    %276 = vmatprep.subr.mxu0 0.0
    %277 = vmatpush1.msra.mxu0 0.0
    %278 = vmatprep.subr.mxu0 0.0
    %279 = vmatpush1.msra.mxu0 0.0
    %280 = vmatprep.subr.mxu0 0.0
    %281 = vmatpush1.msra.mxu0 0.0
    %282 = vmatprep.subr.mxu0 0.0
    %283 = vmatpush1.msra.mxu0 0.0
    %284 = vmatprep.subr.mxu0 0.0
    %285 = vmatpush1.msra.mxu0 0.0
    %286 = vmatprep.subr.mxu0 0.0
    %287 = vmatpush1.msra.mxu0 0.0
    %288 = vmatprep.subr.mxu0 0.0
    %289 = vmatpush1.msra.mxu0 0.0
    %290 = vmatprep.subr.mxu0 0.0
    %291 = vmatpush1.msra.mxu0 0.0
    %292 = vmatprep.subr.mxu0 0.0
    %293 = vmatpush1.msra.mxu0 0.0
    %294 = vmatprep.subr.mxu0 0.0
    %295 = vmatpush1.msra.mxu0 0.0
    %296 = vmatprep.subr.mxu0 0.0
    %297 = vmatpush1.msra.mxu0 0.0
    %298 = vmatprep.subr.mxu0 0.0
    %299 = vmatpush1.msra.mxu0 0.0
    %300 = vmatprep.subr.mxu0 0.0
    %301 = vmatpush1.msra.mxu0 0.0
    %302 = vmatprep.subr.mxu0 0.0
    %303 = vmatpush1.msra.mxu0 0.0
    %304 = vmatprep.subr.mxu0 0.0
    %305 = vmatpush1.msra.mxu0 0.0
    %306 = vmatprep.subr.mxu0 0.0
    %307 = vmatpush1.msra.mxu0 0.0
    %308 = vmatprep.subr.mxu0 0.0
    %309 = vmatpush1.msra.mxu0 0.0
    %310 = vmatprep.subr.mxu0 0.0
    %311 = vmatpush1.msra.mxu0 0.0
    %312 = vmatprep.subr.mxu0 0.0
    %313 = vmatpush1.msra.mxu0 0.0
    %314 = vmatprep.subr.mxu0 0.0
    %315 = vmatpush1.msra.mxu0 0.0
    %316 = vmatprep.subr.mxu0 0.0
    %317 = vmatpush1.msra.mxu0 0.0
    %318 = vmatprep.subr.mxu0 0.0
    %319 = vmatpush1.msra.mxu0 0.0
    %320 = vmatprep.subr.mxu0 0.0
    %321 = vmatpush1.msra.mxu0 0.0
    %322 = vmatprep.subr.mxu0 0.0
    %323 = vmatpush1.msra.mxu0 0.0
    %324 = vmatprep.subr.mxu0 0.0
    %325 = vmatpush1.msra.mxu0 0.0
    %326 = vmatprep.subr.mxu0 0.0
    %327 = vmatpush1.msra.mxu0 0.0
    %328 = vmatprep.subr.mxu0 0.0
    %329 = vmatpush1.msra.mxu0 0.0
    %330 = vmatprep.subr.mxu0 0.0
    %331 = vmatpush1.msra.mxu0 0.0
    %332 = vmatprep.mubr.f32.mxu0 0.0
    %333 = vmatmul.mubr.f32.gmra.mrb[0].mxu0 %v171
    %v334 = vpop.f32.mrb[0].mxu0
    %v335 = vadd.f32 0.0, %v334
    %v336 = vpop.f32.mrb[0].mxu0
    %337 = vdwg.mxu0
    %339 = vrot.lane.b32.xlu0 %v267, 32
    %v340 = vpop.permute.xlu0 %339
    %v341 = vsel %vm169, %v340, 0
    %343 = vmatprep.subr.mxu0 0.0
    %344 = vmatpush1.msra.mxu0 %v160
    %345 = vmatprep.subr.mxu0 0.0
    %346 = vmatpush1.msra.mxu0 %v161
    %347 = vmatprep.subr.mxu0 0.0
    %348 = vmatpush1.msra.mxu0 %v162
    %349 = vmatprep.subr.mxu0 0.0
    %350 = vmatpush1.msra.mxu0 %v163
    %351 = vmatprep.subr.mxu0 0.0
    %352 = vmatpush1.msra.mxu0 0.0
    %353 = vmatprep.subr.mxu0 0.0
    %354 = vmatpush1.msra.mxu0 0.0
    %355 = vmatprep.subr.mxu0 0.0
    %356 = vmatpush1.msra.mxu0 0.0
    %357 = vmatprep.subr.mxu0 0.0
    %358 = vmatpush1.msra.mxu0 0.0
    %359 = vmatprep.subr.mxu0 0.0
    %360 = vmatpush1.msra.mxu0 0.0
    %361 = vmatprep.subr.mxu0 0.0
    %362 = vmatpush1.msra.mxu0 0.0
    %363 = vmatprep.subr.mxu0 0.0
    %364 = vmatpush1.msra.mxu0 0.0
    %365 = vmatprep.subr.mxu0 0.0
    %366 = vmatpush1.msra.mxu0 0.0
    %367 = vmatprep.subr.mxu0 0.0
    %368 = vmatpush1.msra.mxu0 0.0
    %369 = vmatprep.subr.mxu0 0.0
    %370 = vmatpush1.msra.mxu0 0.0
    %371 = vmatprep.subr.mxu0 0.0
    %372 = vmatpush1.msra.mxu0 0.0
    %373 = vmatprep.subr.mxu0 0.0
    %374 = vmatpush1.msra.mxu0 0.0
    %375 = vmatprep.subr.mxu0 0.0
    %376 = vmatpush1.msra.mxu0 0.0
    %377 = vmatprep.subr.mxu0 0.0
    %378 = vmatpush1.msra.mxu0 0.0
    %379 = vmatprep.subr.mxu0 0.0
    %380 = vmatpush1.msra.mxu0 0.0
    %381 = vmatprep.subr.mxu0 0.0
    %382 = vmatpush1.msra.mxu0 0.0
    %383 = vmatprep.subr.mxu0 0.0
    %384 = vmatpush1.msra.mxu0 0.0
    %385 = vmatprep.subr.mxu0 0.0
    %386 = vmatpush1.msra.mxu0 0.0
    %387 = vmatprep.subr.mxu0 0.0
    %388 = vmatpush1.msra.mxu0 0.0
    %389 = vmatprep.subr.mxu0 0.0
    %390 = vmatpush1.msra.mxu0 0.0
    %391 = vmatprep.subr.mxu0 0.0
    %392 = vmatpush1.msra.mxu0 0.0
    %393 = vmatprep.subr.mxu0 0.0
    %394 = vmatpush1.msra.mxu0 0.0
    %395 = vmatprep.subr.mxu0 0.0
    %396 = vmatpush1.msra.mxu0 0.0
    %397 = vmatprep.subr.mxu0 0.0
    %398 = vmatpush1.msra.mxu0 0.0
    %399 = vmatprep.subr.mxu0 0.0
    %400 = vmatpush1.msra.mxu0 0.0
    %401 = vmatprep.subr.mxu0 0.0
    %402 = vmatpush1.msra.mxu0 0.0
    %403 = vmatprep.subr.mxu0 0.0
    %404 = vmatpush1.msra.mxu0 0.0
    %405 = vmatprep.subr.mxu0 0.0
    %406 = vmatpush1.msra.mxu0 0.0
    %407 = vmatprep.mubr.f32.mxu0 0.0
    %408 = vmatmul.mubr.f32.gmra.mrb[0].mxu0 %v341
    %v409 = vpop.f32.mrb[0].mxu0
    %v410 = vadd.f32 %v335, %v409
    %v411 = vpop.f32.mrb[0].mxu0
    %412 = vdwg.mxu0
    %v414 = vlaneseq
    %v415 = vshrl.u32 %v414, 7
    %v416 = vsub.s32 0, %v415
    %v417 = vrot.slane %v168, %v416
    %v419 = vadd.f32 %v410, %v417
    %v420 = vxor.u32 %v419, 2147483648
    %v421 = vmul.f32 %v420, 1.442695
    %v422 = vpow.pop %v421
    %v423 = vadd.f32 %v422, 1.0
    %v424 = vrcp.pop %v423
    %v425 = vmul.f32 1.0, %v424
    %v426 = vtanh.pop %v419
    %v427 = vmul.f32 %v425, 0.0
    %429 = vrot.lane.b32.xlu0 %v426, 64
    %v430 = vpop.permute.xlu0 %429
    %v432 = vmul.f32 %v425, %v430
    %434 = vrot.lane.b32.xlu0 %v432, 32
    %v435 = vpop.permute.xlu0 %434
    %v437 = vadd.f32 %v427, %v435
    %v438 = vtanh.pop %v437
    %440 = vrot.lane.b32.xlu0 %v438, 64
    %v441 = vpop.permute.xlu0 %440
    %v443 = vmul.f32 %v425, %v441
    %444 = vmatprep.subr.mxu0 0.0
    %445 = vmatpush1.msra.mxu0 %v156
    %446 = vmatprep.subr.mxu0 0.0
    %447 = vmatpush1.msra.mxu0 %v157
    %448 = vmatprep.subr.mxu0 0.0
    %449 = vmatpush1.msra.mxu0 %v158
    %450 = vmatprep.subr.mxu0 0.0
    %451 = vmatpush1.msra.mxu0 %v159
    %452 = vmatprep.subr.mxu0 0.0
    %453 = vmatpush1.msra.mxu0 0.0
    %454 = vmatprep.subr.mxu0 0.0
    %455 = vmatpush1.msra.mxu0 0.0
    %456 = vmatprep.subr.mxu0 0.0
    %457 = vmatpush1.msra.mxu0 0.0
    %458 = vmatprep.subr.mxu0 0.0
    %459 = vmatpush1.msra.mxu0 0.0
    %460 = vmatprep.subr.mxu0 0.0
    %461 = vmatpush1.msra.mxu0 0.0
    %462 = vmatprep.subr.mxu0 0.0
    %463 = vmatpush1.msra.mxu0 0.0
    %464 = vmatprep.subr.mxu0 0.0
    %465 = vmatpush1.msra.mxu0 0.0
    %466 = vmatprep.subr.mxu0 0.0
    %467 = vmatpush1.msra.mxu0 0.0
    %468 = vmatprep.subr.mxu0 0.0
    %469 = vmatpush1.msra.mxu0 0.0
    %470 = vmatprep.subr.mxu0 0.0
    %471 = vmatpush1.msra.mxu0 0.0
    %472 = vmatprep.subr.mxu0 0.0
    %473 = vmatpush1.msra.mxu0 0.0
    %474 = vmatprep.subr.mxu0 0.0
    %475 = vmatpush1.msra.mxu0 0.0
    %476 = vmatprep.subr.mxu0 0.0
    %477 = vmatpush1.msra.mxu0 0.0
    %478 = vmatprep.subr.mxu0 0.0
    %479 = vmatpush1.msra.mxu0 0.0
    %480 = vmatprep.subr.mxu0 0.0
    %481 = vmatpush1.msra.mxu0 0.0
    %482 = vmatprep.subr.mxu0 0.0
    %483 = vmatpush1.msra.mxu0 0.0
    %484 = vmatprep.subr.mxu0 0.0
    %485 = vmatpush1.msra.mxu0 0.0
    %486 = vmatprep.subr.mxu0 0.0
    %487 = vmatpush1.msra.mxu0 0.0
    %488 = vmatprep.subr.mxu0 0.0
    %489 = vmatpush1.msra.mxu0 0.0
    %490 = vmatprep.subr.mxu0 0.0
    %491 = vmatpush1.msra.mxu0 0.0
    %492 = vmatprep.subr.mxu0 0.0
    %493 = vmatpush1.msra.mxu0 0.0
    %494 = vmatprep.subr.mxu0 0.0
    %495 = vmatpush1.msra.mxu0 0.0
    %496 = vmatprep.subr.mxu0 0.0
    %497 = vmatpush1.msra.mxu0 0.0
    %498 = vmatprep.subr.mxu0 0.0
    %499 = vmatpush1.msra.mxu0 0.0
    %500 = vmatprep.subr.mxu0 0.0
    %501 = vmatpush1.msra.mxu0 0.0
    %502 = vmatprep.subr.mxu0 0.0
    %503 = vmatpush1.msra.mxu0 0.0
    %504 = vmatprep.subr.mxu0 0.0
    %505 = vmatpush1.msra.mxu0 0.0
    %506 = vmatprep.subr.mxu0 0.0
    %507 = vmatpush1.msra.mxu0 0.0
    %508 = vmatprep.mubr.f32.mxu0 0.0
    %509 = vmatmul.mubr.f32.gmra.mrb[0].mxu0 %v341
    %v510 = vpop.f32.mrb[0].mxu0
    %v511 = vadd.f32 0.0, %v510
    %v512 = vpop.f32.mrb[0].mxu0
    %513 = vdwg.mxu0
    %v515 = vrot.slane %v511, 6
    %v517 = vadd.f32 %v148, %v515
    %v518 = vxor.u32 %v517, 2147483648
    %v519 = vmul.f32 %v518, 1.442695
    %v520 = vpow.pop %v519
    %v521 = vadd.f32 %v520, 1.0
    %v522 = vrcp.pop %v521
    %v523 = vmul.f32 1.0, %v522
    %v524 = vtanh.pop %v517
    %v526 = vrot.slane %v261, 6
    %v528 = vmul.f32 %v523, %v526
    %530 = vrot.lane.b32.xlu0 %v524, 64
    %v531 = vpop.permute.xlu0 %530
    %v533 = vmul.f32 %v523, %v531
    %535 = vrot.lane.b32.xlu0 %v533, 32
    %v536 = vpop.permute.xlu0 %535
    %v538 = vadd.f32 %v528, %v536
    %v539 = vtanh.pop %v538
    %541 = vrot.lane.b32.xlu0 %v539, 64
    %v542 = vpop.permute.xlu0 %541
    %v544 = vmul.f32 %v523, %v542
    %546 = vrot.lane.b32.xlu0 %v443, 32
    %v547 = vpop.permute.xlu0 %546
    %v548 = vsel %vm169, %v547, 0
    %550 = vmatprep.subr.mxu0 0.0
    %551 = vmatpush1.msra.mxu0 %v164
    %552 = vmatprep.subr.mxu0 0.0
    %553 = vmatpush1.msra.mxu0 %v165
    %554 = vmatprep.subr.mxu0 0.0
    %555 = vmatpush1.msra.mxu0 %v166
    %556 = vmatprep.subr.mxu0 0.0
    %557 = vmatpush1.msra.mxu0 %v167
    %558 = vmatprep.subr.mxu0 0.0
    %559 = vmatpush1.msra.mxu0 0.0
    %560 = vmatprep.subr.mxu0 0.0
    %561 = vmatpush1.msra.mxu0 0.0
    %562 = vmatprep.subr.mxu0 0.0
    %563 = vmatpush1.msra.mxu0 0.0
    %564 = vmatprep.subr.mxu0 0.0
    %565 = vmatpush1.msra.mxu0 0.0
    %566 = vmatprep.subr.mxu0 0.0
    %567 = vmatpush1.msra.mxu0 0.0
    %568 = vmatprep.subr.mxu0 0.0
    %569 = vmatpush1.msra.mxu0 0.0
    %570 = vmatprep.subr.mxu0 0.0
    %571 = vmatpush1.msra.mxu0 0.0
    %572 = vmatprep.subr.mxu0 0.0
    %573 = vmatpush1.msra.mxu0 0.0
    %574 = vmatprep.subr.mxu0 0.0
    %575 = vmatpush1.msra.mxu0 0.0
    %576 = vmatprep.subr.mxu0 0.0
    %577 = vmatpush1.msra.mxu0 0.0
    %578 = vmatprep.subr.mxu0 0.0
    %579 = vmatpush1.msra.mxu0 0.0
    %580 = vmatprep.subr.mxu0 0.0
    %581 = vmatpush1.msra.mxu0 0.0
    %582 = vmatprep.subr.mxu0 0.0
    %583 = vmatpush1.msra.mxu0 0.0
    %584 = vmatprep.subr.mxu0 0.0
    %585 = vmatpush1.msra.mxu0 0.0
    %586 = vmatprep.subr.mxu0 0.0
    %587 = vmatpush1.msra.mxu0 0.0
    %588 = vmatprep.subr.mxu0 0.0
    %589 = vmatpush1.msra.mxu0 0.0
    %590 = vmatprep.subr.mxu0 0.0
    %591 = vmatpush1.msra.mxu0 0.0
    %592 = vmatprep.subr.mxu0 0.0
    %593 = vmatpush1.msra.mxu0 0.0
    %594 = vmatprep.subr.mxu0 0.0
    %595 = vmatpush1.msra.mxu0 0.0
    %596 = vmatprep.subr.mxu0 0.0
    %597 = vmatpush1.msra.mxu0 0.0
    %598 = vmatprep.subr.mxu0 0.0
    %599 = vmatpush1.msra.mxu0 0.0
    %600 = vmatprep.subr.mxu0 0.0
    %601 = vmatpush1.msra.mxu0 0.0
    %602 = vmatprep.subr.mxu0 0.0
    %603 = vmatpush1.msra.mxu0 0.0
    %604 = vmatprep.subr.mxu0 0.0
    %605 = vmatpush1.msra.mxu0 0.0
    %606 = vmatprep.subr.mxu0 0.0
    %607 = vmatpush1.msra.mxu0 0.0
    %608 = vmatprep.subr.mxu0 0.0
    %609 = vmatpush1.msra.mxu0 0.0
    %610 = vmatprep.subr.mxu0 0.0
    %611 = vmatpush1.msra.mxu0 0.0
    %612 = vmatprep.subr.mxu0 0.0
    %613 = vmatpush1.msra.mxu0 0.0
    %614 = vmatprep.mubr.f32.mxu0 0.0
    %615 = vmatmul.mubr.f32.gmra.mrb[0].mxu0 %v548
    %v616 = vpop.f32.mrb[0].mxu0
    %v617 = vadd.f32 0.0, %v616
    %v618 = vpop.f32.mrb[0].mxu0
    %619 = vdwg.mxu0
    %v621 = vrot.slane %v544, 2
    %622 = vrot.lane.b32.xlu0 %v621, 32
    %v623 = vpop.permute.xlu0 %622
    %v624 = vsel %vm169, %v623, 0
    %626 = vmatprep.subr.mxu0 0.0
    %627 = vmatpush1.msra.mxu0 %v160
    %628 = vmatprep.subr.mxu0 0.0
    %629 = vmatpush1.msra.mxu0 %v161
    %630 = vmatprep.subr.mxu0 0.0
    %631 = vmatpush1.msra.mxu0 %v162
    %632 = vmatprep.subr.mxu0 0.0
    %633 = vmatpush1.msra.mxu0 %v163
    %634 = vmatprep.subr.mxu0 0.0
    %635 = vmatpush1.msra.mxu0 0.0
    %636 = vmatprep.subr.mxu0 0.0
    %637 = vmatpush1.msra.mxu0 0.0
    %638 = vmatprep.subr.mxu0 0.0
    %639 = vmatpush1.msra.mxu0 0.0
    %640 = vmatprep.subr.mxu0 0.0
    %641 = vmatpush1.msra.mxu0 0.0
    %642 = vmatprep.subr.mxu0 0.0
    %643 = vmatpush1.msra.mxu0 0.0
    %644 = vmatprep.subr.mxu0 0.0
    %645 = vmatpush1.msra.mxu0 0.0
    %646 = vmatprep.subr.mxu0 0.0
    %647 = vmatpush1.msra.mxu0 0.0
    %648 = vmatprep.subr.mxu0 0.0
    %649 = vmatpush1.msra.mxu0 0.0
    %650 = vmatprep.subr.mxu0 0.0
    %651 = vmatpush1.msra.mxu0 0.0
    %652 = vmatprep.subr.mxu0 0.0
    %653 = vmatpush1.msra.mxu0 0.0
    %654 = vmatprep.subr.mxu0 0.0
    %655 = vmatpush1.msra.mxu0 0.0
    %656 = vmatprep.subr.mxu0 0.0
    %657 = vmatpush1.msra.mxu0 0.0
    %658 = vmatprep.subr.mxu0 0.0
    %659 = vmatpush1.msra.mxu0 0.0
    %660 = vmatprep.subr.mxu0 0.0
    %661 = vmatpush1.msra.mxu0 0.0
    %662 = vmatprep.subr.mxu0 0.0
    %663 = vmatpush1.msra.mxu0 0.0
    %664 = vmatprep.subr.mxu0 0.0
    %665 = vmatpush1.msra.mxu0 0.0
    %666 = vmatprep.subr.mxu0 0.0
    %667 = vmatpush1.msra.mxu0 0.0
    %668 = vmatprep.subr.mxu0 0.0
    %669 = vmatpush1.msra.mxu0 0.0
    %670 = vmatprep.subr.mxu0 0.0
    %671 = vmatpush1.msra.mxu0 0.0
    %672 = vmatprep.subr.mxu0 0.0
    %673 = vmatpush1.msra.mxu0 0.0
    %674 = vmatprep.subr.mxu0 0.0
    %675 = vmatpush1.msra.mxu0 0.0
    %676 = vmatprep.subr.mxu0 0.0
    %677 = vmatpush1.msra.mxu0 0.0
    %678 = vmatprep.subr.mxu0 0.0
    %679 = vmatpush1.msra.mxu0 0.0
    %680 = vmatprep.subr.mxu0 0.0
    %681 = vmatpush1.msra.mxu0 0.0
    %682 = vmatprep.subr.mxu0 0.0
    %683 = vmatpush1.msra.mxu0 0.0
    %684 = vmatprep.subr.mxu0 0.0
    %685 = vmatpush1.msra.mxu0 0.0
    %686 = vmatprep.subr.mxu0 0.0
    %687 = vmatpush1.msra.mxu0 0.0
    %688 = vmatprep.subr.mxu0 0.0
    %689 = vmatpush1.msra.mxu0 0.0
    %690 = vmatprep.mubr.f32.mxu0 0.0
    %691 = vmatmul.mubr.f32.gmra.mrb[0].mxu0 %v624
    %v692 = vpop.f32.mrb[0].mxu0
    %v693 = vadd.f32 %v617, %v692
    %v694 = vpop.f32.mrb[0].mxu0
    %695 = vdwg.mxu0
    %v696 = vadd.f32 %v693, %v417
    %v697 = vxor.u32 %v696, 2147483648
    %v698 = vmul.f32 %v697, 1.442695
    %v699 = vpow.pop %v698
    %v700 = vadd.f32 %v699, 1.0
    %v701 = vrcp.pop %v700
    %v702 = vmul.f32 1.0, %v701
    %v703 = vtanh.pop %v696
    %v704 = vmul.f32 %v702, %v437
    %706 = vrot.lane.b32.xlu0 %v703, 64
    %v707 = vpop.permute.xlu0 %706
    %v709 = vmul.f32 %v702, %v707
    %711 = vrot.lane.b32.xlu0 %v709, 32
    %v712 = vpop.permute.xlu0 %711
    %v714 = vadd.f32 %v704, %v712
    %v715 = vtanh.pop %v714
    %717 = vrot.lane.b32.xlu0 %v715, 64
    %v718 = vpop.permute.xlu0 %717
    %v720 = vmul.f32 %v702, %v718
    %721 = vmatprep.subr.mxu0 0.0
    %722 = vmatpush1.msra.mxu0 %v156
    %723 = vmatprep.subr.mxu0 0.0
    %724 = vmatpush1.msra.mxu0 %v157
    %725 = vmatprep.subr.mxu0 0.0
    %726 = vmatpush1.msra.mxu0 %v158
    %727 = vmatprep.subr.mxu0 0.0
    %728 = vmatpush1.msra.mxu0 %v159
    %729 = vmatprep.subr.mxu0 0.0
    %730 = vmatpush1.msra.mxu0 0.0
    %731 = vmatprep.subr.mxu0 0.0
    %732 = vmatpush1.msra.mxu0 0.0
    %733 = vmatprep.subr.mxu0 0.0
    %734 = vmatpush1.msra.mxu0 0.0
    %735 = vmatprep.subr.mxu0 0.0
    %736 = vmatpush1.msra.mxu0 0.0
    %737 = vmatprep.subr.mxu0 0.0
    %738 = vmatpush1.msra.mxu0 0.0
    %739 = vmatprep.subr.mxu0 0.0
    %740 = vmatpush1.msra.mxu0 0.0
    %741 = vmatprep.subr.mxu0 0.0
    %742 = vmatpush1.msra.mxu0 0.0
    %743 = vmatprep.subr.mxu0 0.0
    %744 = vmatpush1.msra.mxu0 0.0
    %745 = vmatprep.subr.mxu0 0.0
    %746 = vmatpush1.msra.mxu0 0.0
    %747 = vmatprep.subr.mxu0 0.0
    %748 = vmatpush1.msra.mxu0 0.0
    %749 = vmatprep.subr.mxu0 0.0
    %750 = vmatpush1.msra.mxu0 0.0
    %751 = vmatprep.subr.mxu0 0.0
    %752 = vmatpush1.msra.mxu0 0.0
    %753 = vmatprep.subr.mxu0 0.0
    %754 = vmatpush1.msra.mxu0 0.0
    %755 = vmatprep.subr.mxu0 0.0
    %756 = vmatpush1.msra.mxu0 0.0
    %757 = vmatprep.subr.mxu0 0.0
    %758 = vmatpush1.msra.mxu0 0.0
    %759 = vmatprep.subr.mxu0 0.0
    %760 = vmatpush1.msra.mxu0 0.0
    %761 = vmatprep.subr.mxu0 0.0
    %762 = vmatpush1.msra.mxu0 0.0
    %763 = vmatprep.subr.mxu0 0.0
    %764 = vmatpush1.msra.mxu0 0.0
    %765 = vmatprep.subr.mxu0 0.0
    %766 = vmatpush1.msra.mxu0 0.0
    %767 = vmatprep.subr.mxu0 0.0
    %768 = vmatpush1.msra.mxu0 0.0
    %769 = vmatprep.subr.mxu0 0.0
    %770 = vmatpush1.msra.mxu0 0.0
    %771 = vmatprep.subr.mxu0 0.0
    %772 = vmatpush1.msra.mxu0 0.0
    %773 = vmatprep.subr.mxu0 0.0
    %774 = vmatpush1.msra.mxu0 0.0
    %775 = vmatprep.subr.mxu0 0.0
    %776 = vmatpush1.msra.mxu0 0.0
    %777 = vmatprep.subr.mxu0 0.0
    %778 = vmatpush1.msra.mxu0 0.0
    %779 = vmatprep.subr.mxu0 0.0
    %780 = vmatpush1.msra.mxu0 0.0
    %781 = vmatprep.subr.mxu0 0.0
    %782 = vmatpush1.msra.mxu0 0.0
    %783 = vmatprep.subr.mxu0 0.0
    %784 = vmatpush1.msra.mxu0 0.0
    %785 = vmatprep.mubr.f32.mxu0 0.0
    %786 = vmatmul.mubr.f32.gmra.mrb[0].mxu0 %v624
    %v787 = vpop.f32.mrb[0].mxu0
    %v788 = vadd.f32 0.0, %v787
    %v789 = vpop.f32.mrb[0].mxu0
    %790 = vdwg.mxu0
    %v792 = vrot.slane %v788, 4
    %v794 = vadd.f32 %v148, %v792
    %v795 = vxor.u32 %v794, 2147483648
    %v796 = vmul.f32 %v795, 1.442695
    %v797 = vpow.pop %v796
    %v798 = vadd.f32 %v797, 1.0
    %v799 = vrcp.pop %v798
    %v800 = vmul.f32 1.0, %v799
    %v801 = vtanh.pop %v794
    %v803 = vrot.slane %v538, 6
    %v805 = vmul.f32 %v800, %v803
    %807 = vrot.lane.b32.xlu0 %v801, 64
    %v808 = vpop.permute.xlu0 %807
    %v810 = vmul.f32 %v800, %v808
    %812 = vrot.lane.b32.xlu0 %v810, 32
    %v813 = vpop.permute.xlu0 %812
    %v815 = vadd.f32 %v805, %v813
    %v816 = vtanh.pop %v815
    %818 = vrot.lane.b32.xlu0 %v816, 64
    %v819 = vpop.permute.xlu0 %818
    %v821 = vmul.f32 %v800, %v819
    %823 = vrot.lane.b32.xlu0 %v720, 32
    %v824 = vpop.permute.xlu0 %823
    %v825 = vsel %vm169, %v824, 0
    %827 = vmatprep.subr.mxu0 0.0
    %828 = vmatpush1.msra.mxu0 %v164
    %829 = vmatprep.subr.mxu0 0.0
    %830 = vmatpush1.msra.mxu0 %v165
    %831 = vmatprep.subr.mxu0 0.0
    %832 = vmatpush1.msra.mxu0 %v166
    %833 = vmatprep.subr.mxu0 0.0
    %834 = vmatpush1.msra.mxu0 %v167
    %835 = vmatprep.subr.mxu0 0.0
    %836 = vmatpush1.msra.mxu0 0.0
    %837 = vmatprep.subr.mxu0 0.0
    %838 = vmatpush1.msra.mxu0 0.0
    %839 = vmatprep.subr.mxu0 0.0
    %840 = vmatpush1.msra.mxu0 0.0
    %841 = vmatprep.subr.mxu0 0.0
    %842 = vmatpush1.msra.mxu0 0.0
    %843 = vmatprep.subr.mxu0 0.0
    %844 = vmatpush1.msra.mxu0 0.0
    %845 = vmatprep.subr.mxu0 0.0
    %846 = vmatpush1.msra.mxu0 0.0
    %847 = vmatprep.subr.mxu0 0.0
    %848 = vmatpush1.msra.mxu0 0.0
    %849 = vmatprep.subr.mxu0 0.0
    %850 = vmatpush1.msra.mxu0 0.0
    %851 = vmatprep.subr.mxu0 0.0
    %852 = vmatpush1.msra.mxu0 0.0
    %853 = vmatprep.subr.mxu0 0.0
    %854 = vmatpush1.msra.mxu0 0.0
    %855 = vmatprep.subr.mxu0 0.0
    %856 = vmatpush1.msra.mxu0 0.0
    %857 = vmatprep.subr.mxu0 0.0
    %858 = vmatpush1.msra.mxu0 0.0
    %859 = vmatprep.subr.mxu0 0.0
    %860 = vmatpush1.msra.mxu0 0.0
    %861 = vmatprep.subr.mxu0 0.0
    %862 = vmatpush1.msra.mxu0 0.0
    %863 = vmatprep.subr.mxu0 0.0
    %864 = vmatpush1.msra.mxu0 0.0
    %865 = vmatprep.subr.mxu0 0.0
    %866 = vmatpush1.msra.mxu0 0.0
    %867 = vmatprep.subr.mxu0 0.0
    %868 = vmatpush1.msra.mxu0 0.0
    %869 = vmatprep.subr.mxu0 0.0
    %870 = vmatpush1.msra.mxu0 0.0
    %871 = vmatprep.subr.mxu0 0.0
    %872 = vmatpush1.msra.mxu0 0.0
    %873 = vmatprep.subr.mxu0 0.0
    %874 = vmatpush1.msra.mxu0 0.0
    %875 = vmatprep.subr.mxu0 0.0
    %876 = vmatpush1.msra.mxu0 0.0
    %877 = vmatprep.subr.mxu0 0.0
    %878 = vmatpush1.msra.mxu0 0.0
    %879 = vmatprep.subr.mxu0 0.0
    %880 = vmatpush1.msra.mxu0 0.0
    %881 = vmatprep.subr.mxu0 0.0
    %882 = vmatpush1.msra.mxu0 0.0
    %883 = vmatprep.subr.mxu0 0.0
    %884 = vmatpush1.msra.mxu0 0.0
    %885 = vmatprep.subr.mxu0 0.0
    %886 = vmatpush1.msra.mxu0 0.0
    %887 = vmatprep.subr.mxu0 0.0
    %888 = vmatpush1.msra.mxu0 0.0
    %889 = vmatprep.subr.mxu0 0.0
    %890 = vmatpush1.msra.mxu0 0.0
    %891 = vmatprep.mubr.f32.mxu0 0.0
    %892 = vmatmul.mubr.f32.gmra.mrb[0].mxu0 %v825
    %v893 = vpop.f32.mrb[0].mxu0
    %v894 = vadd.f32 0.0, %v893
    %v895 = vpop.f32.mrb[0].mxu0
    %896 = vdwg.mxu0
    %v898 = vrot.slane %v821, 4
    %899 = vrot.lane.b32.xlu0 %v898, 32
    %v900 = vpop.permute.xlu0 %899
    %v901 = vsel %vm169, %v900, 0
    %903 = vmatprep.subr.mxu0 0.0
    %904 = vmatpush1.msra.mxu0 %v160
    %905 = vmatprep.subr.mxu0 0.0
    %906 = vmatpush1.msra.mxu0 %v161
    %907 = vmatprep.subr.mxu0 0.0
    %908 = vmatpush1.msra.mxu0 %v162
    %909 = vmatprep.subr.mxu0 0.0
    %910 = vmatpush1.msra.mxu0 %v163
    %911 = vmatprep.subr.mxu0 0.0
    %912 = vmatpush1.msra.mxu0 0.0
    %913 = vmatprep.subr.mxu0 0.0
    %914 = vmatpush1.msra.mxu0 0.0
    %915 = vmatprep.subr.mxu0 0.0
    %916 = vmatpush1.msra.mxu0 0.0
    %917 = vmatprep.subr.mxu0 0.0
    %918 = vmatpush1.msra.mxu0 0.0
    %919 = vmatprep.subr.mxu0 0.0
    %920 = vmatpush1.msra.mxu0 0.0
    %921 = vmatprep.subr.mxu0 0.0
    %922 = vmatpush1.msra.mxu0 0.0
    %923 = vmatprep.subr.mxu0 0.0
    %924 = vmatpush1.msra.mxu0 0.0
    %925 = vmatprep.subr.mxu0 0.0
    %926 = vmatpush1.msra.mxu0 0.0
    %927 = vmatprep.subr.mxu0 0.0
    %928 = vmatpush1.msra.mxu0 0.0
    %929 = vmatprep.subr.mxu0 0.0
    %930 = vmatpush1.msra.mxu0 0.0
    %931 = vmatprep.subr.mxu0 0.0
    %932 = vmatpush1.msra.mxu0 0.0
    %933 = vmatprep.subr.mxu0 0.0
    %934 = vmatpush1.msra.mxu0 0.0
    %935 = vmatprep.subr.mxu0 0.0
    %936 = vmatpush1.msra.mxu0 0.0
    %937 = vmatprep.subr.mxu0 0.0
    %938 = vmatpush1.msra.mxu0 0.0
    %939 = vmatprep.subr.mxu0 0.0
    %940 = vmatpush1.msra.mxu0 0.0
    %941 = vmatprep.subr.mxu0 0.0
    %942 = vmatpush1.msra.mxu0 0.0
    %943 = vmatprep.subr.mxu0 0.0
    %944 = vmatpush1.msra.mxu0 0.0
    %945 = vmatprep.subr.mxu0 0.0
    %946 = vmatpush1.msra.mxu0 0.0
    %947 = vmatprep.subr.mxu0 0.0
    %948 = vmatpush1.msra.mxu0 0.0
    %949 = vmatprep.subr.mxu0 0.0
    %950 = vmatpush1.msra.mxu0 0.0
    %951 = vmatprep.subr.mxu0 0.0
    %952 = vmatpush1.msra.mxu0 0.0
    %953 = vmatprep.subr.mxu0 0.0
    %954 = vmatpush1.msra.mxu0 0.0
    %955 = vmatprep.subr.mxu0 0.0
    %956 = vmatpush1.msra.mxu0 0.0
    %957 = vmatprep.subr.mxu0 0.0
    %958 = vmatpush1.msra.mxu0 0.0
    %959 = vmatprep.subr.mxu0 0.0
    %960 = vmatpush1.msra.mxu0 0.0
    %961 = vmatprep.subr.mxu0 0.0
    %962 = vmatpush1.msra.mxu0 0.0
    %963 = vmatprep.subr.mxu0 0.0
    %964 = vmatpush1.msra.mxu0 0.0
    %965 = vmatprep.subr.mxu0 0.0
    %966 = vmatpush1.msra.mxu0 0.0
    %967 = vmatprep.mubr.f32.mxu0 0.0
    %968 = vmatmul.mubr.f32.gmra.mrb[0].mxu0 %v901
    %v969 = vpop.f32.mrb[0].mxu0
    %v970 = vadd.f32 %v894, %v969
    %v971 = vpop.f32.mrb[0].mxu0
    %972 = vdwg.mxu0
    %v973 = vadd.f32 %v970, %v417
    %v974 = vxor.u32 %v973, 2147483648
    %v975 = vmul.f32 %v974, 1.442695
    %v976 = vpow.pop %v975
    %v977 = vadd.f32 %v976, 1.0
    %v978 = vrcp.pop %v977
    %v979 = vmul.f32 1.0, %v978
    %v980 = vtanh.pop %v973
    %v981 = vmul.f32 %v979, %v714
    %983 = vrot.lane.b32.xlu0 %v980, 64
    %v984 = vpop.permute.xlu0 %983
    %v986 = vmul.f32 %v979, %v984
    %988 = vrot.lane.b32.xlu0 %v986, 32
    %v989 = vpop.permute.xlu0 %988
    %v991 = vadd.f32 %v981, %v989
    %v992 = vtanh.pop %v991
    %994 = vrot.lane.b32.xlu0 %v992, 64
    %v995 = vpop.permute.xlu0 %994
    %v997 = vmul.f32 %v979, %v995
    %998 = vmatprep.subr.mxu0 0.0
    %999 = vmatpush1.msra.mxu0 %v156
    %1000 = vmatprep.subr.mxu0 0.0
    %1001 = vmatpush1.msra.mxu0 %v157
    %1002 = vmatprep.subr.mxu0 0.0
    %1003 = vmatpush1.msra.mxu0 %v158
    %1004 = vmatprep.subr.mxu0 0.0
    %1005 = vmatpush1.msra.mxu0 %v159
    %1006 = vmatprep.subr.mxu0 0.0
    %1007 = vmatpush1.msra.mxu0 0.0
    %1008 = vmatprep.subr.mxu0 0.0
    %1009 = vmatpush1.msra.mxu0 0.0
    %1010 = vmatprep.subr.mxu0 0.0
    %1011 = vmatpush1.msra.mxu0 0.0
    %1012 = vmatprep.subr.mxu0 0.0
    %1013 = vmatpush1.msra.mxu0 0.0
    %1014 = vmatprep.subr.mxu0 0.0
    %1015 = vmatpush1.msra.mxu0 0.0
    %1016 = vmatprep.subr.mxu0 0.0
    %1017 = vmatpush1.msra.mxu0 0.0
    %1018 = vmatprep.subr.mxu0 0.0
    %1019 = vmatpush1.msra.mxu0 0.0
    %1020 = vmatprep.subr.mxu0 0.0
    %1021 = vmatpush1.msra.mxu0 0.0
    %1022 = vmatprep.subr.mxu0 0.0
    %1023 = vmatpush1.msra.mxu0 0.0
    %1024 = vmatprep.subr.mxu0 0.0
    %1025 = vmatpush1.msra.mxu0 0.0
    %1026 = vmatprep.subr.mxu0 0.0
    %1027 = vmatpush1.msra.mxu0 0.0
    %1028 = vmatprep.subr.mxu0 0.0
    %1029 = vmatpush1.msra.mxu0 0.0
    %1030 = vmatprep.subr.mxu0 0.0
    %1031 = vmatpush1.msra.mxu0 0.0
    %1032 = vmatprep.subr.mxu0 0.0
    %1033 = vmatpush1.msra.mxu0 0.0
    %1034 = vmatprep.subr.mxu0 0.0
    %1035 = vmatpush1.msra.mxu0 0.0
    %1036 = vmatprep.subr.mxu0 0.0
    %1037 = vmatpush1.msra.mxu0 0.0
    %1038 = vmatprep.subr.mxu0 0.0
    %1039 = vmatpush1.msra.mxu0 0.0
    %1040 = vmatprep.subr.mxu0 0.0
    %1041 = vmatpush1.msra.mxu0 0.0
    %1042 = vmatprep.subr.mxu0 0.0
    %1043 = vmatpush1.msra.mxu0 0.0
    %1044 = vmatprep.subr.mxu0 0.0
    %1045 = vmatpush1.msra.mxu0 0.0
    %1046 = vmatprep.subr.mxu0 0.0
    %1047 = vmatpush1.msra.mxu0 0.0
    %1048 = vmatprep.subr.mxu0 0.0
    %1049 = vmatpush1.msra.mxu0 0.0
    %1050 = vmatprep.subr.mxu0 0.0
    %1051 = vmatpush1.msra.mxu0 0.0
    %1052 = vmatprep.subr.mxu0 0.0
    %1053 = vmatpush1.msra.mxu0 0.0
    %1054 = vmatprep.subr.mxu0 0.0
    %1055 = vmatpush1.msra.mxu0 0.0
    %1056 = vmatprep.subr.mxu0 0.0
    %1057 = vmatpush1.msra.mxu0 0.0
    %1058 = vmatprep.subr.mxu0 0.0
    %1059 = vmatpush1.msra.mxu0 0.0
    %1060 = vmatprep.subr.mxu0 0.0
    %1061 = vmatpush1.msra.mxu0 0.0
    %1062 = vmatprep.mubr.f32.mxu0 0.0
    %1063 = vmatmul.mubr.f32.gmra.mrb[0].mxu0 %v901
    %v1064 = vpop.f32.mrb[0].mxu0
    %v1065 = vadd.f32 0.0, %v1064
    %v1066 = vpop.f32.mrb[0].mxu0
    %1067 = vdwg.mxu0
    %v1069 = vrot.slane %v1065, 2
    %v1071 = vadd.f32 %v148, %v1069
    %v1072 = vxor.u32 %v1071, 2147483648
    %v1073 = vmul.f32 %v1072, 1.442695
    %v1074 = vpow.pop %v1073
    %v1075 = vadd.f32 %v1074, 1.0
    %v1076 = vrcp.pop %v1075
    %v1077 = vmul.f32 1.0, %v1076
    %v1078 = vtanh.pop %v1071
    %v1080 = vrot.slane %v815, 6
    %v1082 = vmul.f32 %v1077, %v1080
    %1084 = vrot.lane.b32.xlu0 %v1078, 64
    %v1085 = vpop.permute.xlu0 %1084
    %v1087 = vmul.f32 %v1077, %v1085
    %1089 = vrot.lane.b32.xlu0 %v1087, 32
    %v1090 = vpop.permute.xlu0 %1089
    %v1092 = vadd.f32 %v1082, %v1090
    %v1093 = vtanh.pop %v1092
    %1095 = vrot.lane.b32.xlu0 %v1093, 64
    %v1096 = vpop.permute.xlu0 %1095
    %v1098 = vmul.f32 %v1077, %v1096
    %1100 = vrot.lane.b32.xlu0 %v997, 32
    %v1101 = vpop.permute.xlu0 %1100
    %v1102 = vsel %vm169, %v1101, 0
    %1104 = vmatprep.subr.mxu0 0.0
    %1105 = vmatpush1.msra.mxu0 %v164
    %1106 = vmatprep.subr.mxu0 0.0
    %1107 = vmatpush1.msra.mxu0 %v165
    %1108 = vmatprep.subr.mxu0 0.0
    %1109 = vmatpush1.msra.mxu0 %v166
    %1110 = vmatprep.subr.mxu0 0.0
    %1111 = vmatpush1.msra.mxu0 %v167
    %1112 = vmatprep.subr.mxu0 0.0
    %1113 = vmatpush1.msra.mxu0 0.0
    %1114 = vmatprep.subr.mxu0 0.0
    %1115 = vmatpush1.msra.mxu0 0.0
    %1116 = vmatprep.subr.mxu0 0.0
    %1117 = vmatpush1.msra.mxu0 0.0
    %1118 = vmatprep.subr.mxu0 0.0
    %1119 = vmatpush1.msra.mxu0 0.0
    %1120 = vmatprep.subr.mxu0 0.0
    %1121 = vmatpush1.msra.mxu0 0.0
    %1122 = vmatprep.subr.mxu0 0.0
    %1123 = vmatpush1.msra.mxu0 0.0
    %1124 = vmatprep.subr.mxu0 0.0
    %1125 = vmatpush1.msra.mxu0 0.0
    %1126 = vmatprep.subr.mxu0 0.0
    %1127 = vmatpush1.msra.mxu0 0.0
    %1128 = vmatprep.subr.mxu0 0.0
    %1129 = vmatpush1.msra.mxu0 0.0
    %1130 = vmatprep.subr.mxu0 0.0
    %1131 = vmatpush1.msra.mxu0 0.0
    %1132 = vmatprep.subr.mxu0 0.0
    %1133 = vmatpush1.msra.mxu0 0.0
    %1134 = vmatprep.subr.mxu0 0.0
    %1135 = vmatpush1.msra.mxu0 0.0
    %1136 = vmatprep.subr.mxu0 0.0
    %1137 = vmatpush1.msra.mxu0 0.0
    %1138 = vmatprep.subr.mxu0 0.0
    %1139 = vmatpush1.msra.mxu0 0.0
    %1140 = vmatprep.subr.mxu0 0.0
    %1141 = vmatpush1.msra.mxu0 0.0
    %1142 = vmatprep.subr.mxu0 0.0
    %1143 = vmatpush1.msra.mxu0 0.0
    %1144 = vmatprep.subr.mxu0 0.0
    %1145 = vmatpush1.msra.mxu0 0.0
    %1146 = vmatprep.subr.mxu0 0.0
    %1147 = vmatpush1.msra.mxu0 0.0
    %1148 = vmatprep.subr.mxu0 0.0
    %1149 = vmatpush1.msra.mxu0 0.0
    %1150 = vmatprep.subr.mxu0 0.0
    %1151 = vmatpush1.msra.mxu0 0.0
    %1152 = vmatprep.subr.mxu0 0.0
    %1153 = vmatpush1.msra.mxu0 0.0
    %1154 = vmatprep.subr.mxu0 0.0
    %1155 = vmatpush1.msra.mxu0 0.0
    %1156 = vmatprep.subr.mxu0 0.0
    %1157 = vmatpush1.msra.mxu0 0.0
    %1158 = vmatprep.subr.mxu0 0.0
    %1159 = vmatpush1.msra.mxu0 0.0
    %1160 = vmatprep.subr.mxu0 0.0
    %1161 = vmatpush1.msra.mxu0 0.0
    %1162 = vmatprep.subr.mxu0 0.0
    %1163 = vmatpush1.msra.mxu0 0.0
    %1164 = vmatprep.subr.mxu0 0.0
    %1165 = vmatpush1.msra.mxu0 0.0
    %1166 = vmatprep.subr.mxu0 0.0
    %1167 = vmatpush1.msra.mxu0 0.0
    %1168 = vmatprep.mubr.f32.mxu0 0.0
    %1169 = vmatmul.mubr.f32.gmra.mrb[0].mxu0 %v1102
    %v1170 = vpop.f32.mrb[0].mxu0
    %v1171 = vadd.f32 0.0, %v1170
    %v1172 = vpop.f32.mrb[0].mxu0
    %1173 = vdwg.mxu0
    %v1175 = vrot.slane %v1098, 6
    %1176 = vrot.lane.b32.xlu0 %v1175, 32
    %v1177 = vpop.permute.xlu0 %1176
    %v1178 = vsel %vm169, %v1177, 0
    %1180 = vmatprep.subr.mxu0 0.0
    %1181 = vmatpush1.msra.mxu0 %v160
    %1182 = vmatprep.subr.mxu0 0.0
    %1183 = vmatpush1.msra.mxu0 %v161
    %1184 = vmatprep.subr.mxu0 0.0
    %1185 = vmatpush1.msra.mxu0 %v162
    %1186 = vmatprep.subr.mxu0 0.0
    %1187 = vmatpush1.msra.mxu0 %v163
    %1188 = vmatprep.subr.mxu0 0.0
    %1189 = vmatpush1.msra.mxu0 0.0
    %1190 = vmatprep.subr.mxu0 0.0
    %1191 = vmatpush1.msra.mxu0 0.0
    %1192 = vmatprep.subr.mxu0 0.0
    %1193 = vmatpush1.msra.mxu0 0.0
    %1194 = vmatprep.subr.mxu0 0.0
    %1195 = vmatpush1.msra.mxu0 0.0
    %1196 = vmatprep.subr.mxu0 0.0
    %1197 = vmatpush1.msra.mxu0 0.0
    %1198 = vmatprep.subr.mxu0 0.0
    %1199 = vmatpush1.msra.mxu0 0.0
    %1200 = vmatprep.subr.mxu0 0.0
    %1201 = vmatpush1.msra.mxu0 0.0
    %1202 = vmatprep.subr.mxu0 0.0
    %1203 = vmatpush1.msra.mxu0 0.0
    %1204 = vmatprep.subr.mxu0 0.0
    %1205 = vmatpush1.msra.mxu0 0.0
    %1206 = vmatprep.subr.mxu0 0.0
    %1207 = vmatpush1.msra.mxu0 0.0
    %1208 = vmatprep.subr.mxu0 0.0
    %1209 = vmatpush1.msra.mxu0 0.0
    %1210 = vmatprep.subr.mxu0 0.0
    %1211 = vmatpush1.msra.mxu0 0.0
    %1212 = vmatprep.subr.mxu0 0.0
    %1213 = vmatpush1.msra.mxu0 0.0
    %1214 = vmatprep.subr.mxu0 0.0
    %1215 = vmatpush1.msra.mxu0 0.0
    %1216 = vmatprep.subr.mxu0 0.0
    %1217 = vmatpush1.msra.mxu0 0.0
    %1218 = vmatprep.subr.mxu0 0.0
    %1219 = vmatpush1.msra.mxu0 0.0
    %1220 = vmatprep.subr.mxu0 0.0
    %1221 = vmatpush1.msra.mxu0 0.0
    %1222 = vmatprep.subr.mxu0 0.0
    %1223 = vmatpush1.msra.mxu0 0.0
    %1224 = vmatprep.subr.mxu0 0.0
    %1225 = vmatpush1.msra.mxu0 0.0
    %1226 = vmatprep.subr.mxu0 0.0
    %1227 = vmatpush1.msra.mxu0 0.0
    %1228 = vmatprep.subr.mxu0 0.0
    %1229 = vmatpush1.msra.mxu0 0.0
    %1230 = vmatprep.subr.mxu0 0.0
    %1231 = vmatpush1.msra.mxu0 0.0
    %1232 = vmatprep.subr.mxu0 0.0
    %1233 = vmatpush1.msra.mxu0 0.0
    %1234 = vmatprep.subr.mxu0 0.0
    %1235 = vmatpush1.msra.mxu0 0.0
    %1236 = vmatprep.subr.mxu0 0.0
    %1237 = vmatpush1.msra.mxu0 0.0
    %1238 = vmatprep.subr.mxu0 0.0
    %1239 = vmatpush1.msra.mxu0 0.0
    %1240 = vmatprep.subr.mxu0 0.0
    %1241 = vmatpush1.msra.mxu0 0.0
    %1242 = vmatprep.subr.mxu0 0.0
    %1243 = vmatpush1.msra.mxu0 0.0
    %1244 = vmatprep.mubr.f32.mxu0 0.0
    %1245 = vmatmul.mubr.f32.gmra.mrb[0].mxu0 %v1178
    %v1246 = vpop.f32.mrb[0].mxu0
    %v1247 = vadd.f32 %v1171, %v1246
    %v1248 = vpop.f32.mrb[0].mxu0
    %1249 = vdwg.mxu0
    %v1250 = vadd.f32 %v1247, %v417
    %v1251 = vxor.u32 %v1250, 2147483648
    %v1252 = vmul.f32 %v1251, 1.442695
    %v1253 = vpow.pop %v1252
    %v1254 = vadd.f32 %v1253, 1.0
    %v1255 = vrcp.pop %v1254
    %v1256 = vmul.f32 1.0, %v1255
    %v1257 = vtanh.pop %v1250
    %v1258 = vmul.f32 %v1256, %v991
    %1260 = vrot.lane.b32.xlu0 %v1257, 64
    %v1261 = vpop.permute.xlu0 %1260
    %v1263 = vmul.f32 %v1256, %v1261
    %1265 = vrot.lane.b32.xlu0 %v1263, 32
    %v1266 = vpop.permute.xlu0 %1265
    %v1268 = vadd.f32 %v1258, %v1266
    %v1269 = vtanh.pop %v1268
    %1271 = vrot.lane.b32.xlu0 %v1269, 64
    %v1272 = vpop.permute.xlu0 %1271
    %v1274 = vmul.f32 %v1256, %v1272
    %1275 = vmatprep.subr.mxu0 0.0
    %1276 = vmatpush1.msra.mxu0 %v156
    %1277 = vmatprep.subr.mxu0 0.0
    %1278 = vmatpush1.msra.mxu0 %v157
    %1279 = vmatprep.subr.mxu0 0.0
    %1280 = vmatpush1.msra.mxu0 %v158
    %1281 = vmatprep.subr.mxu0 0.0
    %1282 = vmatpush1.msra.mxu0 %v159
    %1283 = vmatprep.subr.mxu0 0.0
    %1284 = vmatpush1.msra.mxu0 0.0
    %1285 = vmatprep.subr.mxu0 0.0
    %1286 = vmatpush1.msra.mxu0 0.0
    %1287 = vmatprep.subr.mxu0 0.0
    %1288 = vmatpush1.msra.mxu0 0.0
    %1289 = vmatprep.subr.mxu0 0.0
    %1290 = vmatpush1.msra.mxu0 0.0
    %1291 = vmatprep.subr.mxu0 0.0
    %1292 = vmatpush1.msra.mxu0 0.0
    %1293 = vmatprep.subr.mxu0 0.0
    %1294 = vmatpush1.msra.mxu0 0.0
    %1295 = vmatprep.subr.mxu0 0.0
    %1296 = vmatpush1.msra.mxu0 0.0
    %1297 = vmatprep.subr.mxu0 0.0
    %1298 = vmatpush1.msra.mxu0 0.0
    %1299 = vmatprep.subr.mxu0 0.0
    %1300 = vmatpush1.msra.mxu0 0.0
    %1301 = vmatprep.subr.mxu0 0.0
    %1302 = vmatpush1.msra.mxu0 0.0
    %1303 = vmatprep.subr.mxu0 0.0
    %1304 = vmatpush1.msra.mxu0 0.0
    %1305 = vmatprep.subr.mxu0 0.0
    %1306 = vmatpush1.msra.mxu0 0.0
    %1307 = vmatprep.subr.mxu0 0.0
    %1308 = vmatpush1.msra.mxu0 0.0
    %1309 = vmatprep.subr.mxu0 0.0
    %1310 = vmatpush1.msra.mxu0 0.0
    %1311 = vmatprep.subr.mxu0 0.0
    %1312 = vmatpush1.msra.mxu0 0.0
    %1313 = vmatprep.subr.mxu0 0.0
    %1314 = vmatpush1.msra.mxu0 0.0
    %1315 = vmatprep.subr.mxu0 0.0
    %1316 = vmatpush1.msra.mxu0 0.0
    %1317 = vmatprep.subr.mxu0 0.0
    %1318 = vmatpush1.msra.mxu0 0.0
    %1319 = vmatprep.subr.mxu0 0.0
    %1320 = vmatpush1.msra.mxu0 0.0
    %1321 = vmatprep.subr.mxu0 0.0
    %1322 = vmatpush1.msra.mxu0 0.0
    %1323 = vmatprep.subr.mxu0 0.0
    %1324 = vmatpush1.msra.mxu0 0.0
    %1325 = vmatprep.subr.mxu0 0.0
    %1326 = vmatpush1.msra.mxu0 0.0
    %1327 = vmatprep.subr.mxu0 0.0
    %1328 = vmatpush1.msra.mxu0 0.0
    %1329 = vmatprep.subr.mxu0 0.0
    %1330 = vmatpush1.msra.mxu0 0.0
    %1331 = vmatprep.subr.mxu0 0.0
    %1332 = vmatpush1.msra.mxu0 0.0
    %1333 = vmatprep.subr.mxu0 0.0
    %1334 = vmatpush1.msra.mxu0 0.0
    %1335 = vmatprep.subr.mxu0 0.0
    %1336 = vmatpush1.msra.mxu0 0.0
    %1337 = vmatprep.subr.mxu0 0.0
    %1338 = vmatpush1.msra.mxu0 0.0
    %1339 = vmatprep.mubr.f32.mxu0 0.0
    %1340 = vmatmul.mubr.f32.gmra.mrb[0].mxu0 %v1178
    %v1341 = vpop.f32.mrb[0].mxu0
    %v1342 = vadd.f32 0.0, %v1341
    %v1343 = vpop.f32.mrb[0].mxu0
    %1344 = vdwg.mxu0
    %v1345 = vadd.f32 %v153, %v1342
    %v1346 = vxor.u32 %v1345, 2147483648
    %v1347 = vmul.f32 %v1346, 1.442695
    %v1348 = vpow.pop %v1347
    %v1349 = vadd.f32 %v1348, 1.0
    %v1350 = vrcp.pop %v1349
    %v1351 = vmul.f32 1.0, %v1350
    %v1352 = vtanh.pop %v1345
    %v1354 = vrot.slane %v1092, 6
    %v1356 = vmul.f32 %v1351, %v1354
    %1358 = vrot.lane.b32.xlu0 %v1352, 64
    %v1359 = vpop.permute.xlu0 %1358
    %v1361 = vmul.f32 %v1351, %v1359
    %1363 = vrot.lane.b32.xlu0 %v1361, 32
    %v1364 = vpop.permute.xlu0 %1363
    %v1366 = vadd.f32 %v1356, %v1364
    %v1367 = vtanh.pop %v1366
    %1369 = vrot.lane.b32.xlu0 %v1367, 64
    %v1370 = vpop.permute.xlu0 %1369
    %v1372 = vmul.f32 %v1351, %v1370
    %1374 = vrot.lane.b32.xlu0 %v1274, 32
    %v1375 = vpop.permute.xlu0 %1374
    %v1376 = vsel %vm169, %v1375, 0
    %1378 = vmatprep.subr.mxu0 0.0
    %1379 = vmatpush1.msra.mxu0 %v164
    %1380 = vmatprep.subr.mxu0 0.0
    %1381 = vmatpush1.msra.mxu0 %v165
    %1382 = vmatprep.subr.mxu0 0.0
    %1383 = vmatpush1.msra.mxu0 %v166
    %1384 = vmatprep.subr.mxu0 0.0
    %1385 = vmatpush1.msra.mxu0 %v167
    %1386 = vmatprep.subr.mxu0 0.0
    %1387 = vmatpush1.msra.mxu0 0.0
    %1388 = vmatprep.subr.mxu0 0.0
    %1389 = vmatpush1.msra.mxu0 0.0
    %1390 = vmatprep.subr.mxu0 0.0
    %1391 = vmatpush1.msra.mxu0 0.0
    %1392 = vmatprep.subr.mxu0 0.0
    %1393 = vmatpush1.msra.mxu0 0.0
    %1394 = vmatprep.subr.mxu0 0.0
    %1395 = vmatpush1.msra.mxu0 0.0
    %1396 = vmatprep.subr.mxu0 0.0
    %1397 = vmatpush1.msra.mxu0 0.0
    %1398 = vmatprep.subr.mxu0 0.0
    %1399 = vmatpush1.msra.mxu0 0.0
    %1400 = vmatprep.subr.mxu0 0.0
    %1401 = vmatpush1.msra.mxu0 0.0
    %1402 = vmatprep.subr.mxu0 0.0
    %1403 = vmatpush1.msra.mxu0 0.0
    %1404 = vmatprep.subr.mxu0 0.0
    %1405 = vmatpush1.msra.mxu0 0.0
    %1406 = vmatprep.subr.mxu0 0.0
    %1407 = vmatpush1.msra.mxu0 0.0
    %1408 = vmatprep.subr.mxu0 0.0
    %1409 = vmatpush1.msra.mxu0 0.0
    %1410 = vmatprep.subr.mxu0 0.0
    %1411 = vmatpush1.msra.mxu0 0.0
    %1412 = vmatprep.subr.mxu0 0.0
    %1413 = vmatpush1.msra.mxu0 0.0
    %1414 = vmatprep.subr.mxu0 0.0
    %1415 = vmatpush1.msra.mxu0 0.0
    %1416 = vmatprep.subr.mxu0 0.0
    %1417 = vmatpush1.msra.mxu0 0.0
    %1418 = vmatprep.subr.mxu0 0.0
    %1419 = vmatpush1.msra.mxu0 0.0
    %1420 = vmatprep.subr.mxu0 0.0
    %1421 = vmatpush1.msra.mxu0 0.0
    %1422 = vmatprep.subr.mxu0 0.0
    %1423 = vmatpush1.msra.mxu0 0.0
    %1424 = vmatprep.subr.mxu0 0.0
    %1425 = vmatpush1.msra.mxu0 0.0
    %1426 = vmatprep.subr.mxu0 0.0
    %1427 = vmatpush1.msra.mxu0 0.0
    %1428 = vmatprep.subr.mxu0 0.0
    %1429 = vmatpush1.msra.mxu0 0.0
    %1430 = vmatprep.subr.mxu0 0.0
    %1431 = vmatpush1.msra.mxu0 0.0
    %1432 = vmatprep.subr.mxu0 0.0
    %1433 = vmatpush1.msra.mxu0 0.0
    %1434 = vmatprep.subr.mxu0 0.0
    %1435 = vmatpush1.msra.mxu0 0.0
    %1436 = vmatprep.subr.mxu0 0.0
    %1437 = vmatpush1.msra.mxu0 0.0
    %1438 = vmatprep.subr.mxu0 0.0
    %1439 = vmatpush1.msra.mxu0 0.0
    %1440 = vmatprep.subr.mxu0 0.0
    %1441 = vmatpush1.msra.mxu0 0.0
    %1442 = vmatprep.mubr.f32.mxu0 0.0
    %1443 = vmatmul.mubr.f32.gmra.mrb[0].mxu0 %v1376
    %v1444 = vpop.f32.mrb[0].mxu0
    %v1445 = vadd.f32 0.0, %v1444
    %v1446 = vpop.f32.mrb[0].mxu0
    %1447 = vdwg.mxu0
    %1449 = vrot.lane.b32.xlu0 %v1372, 32
    %v1450 = vpop.permute.xlu0 %1449
    %v1451 = vsel %vm169, %v1450, 0
    %1453 = vmatprep.subr.mxu0 0.0
    %1454 = vmatpush1.msra.mxu0 %v160
    %1455 = vmatprep.subr.mxu0 0.0
    %1456 = vmatpush1.msra.mxu0 %v161
    %1457 = vmatprep.subr.mxu0 0.0
    %1458 = vmatpush1.msra.mxu0 %v162
    %1459 = vmatprep.subr.mxu0 0.0
    %1460 = vmatpush1.msra.mxu0 %v163
    %1461 = vmatprep.subr.mxu0 0.0
    %1462 = vmatpush1.msra.mxu0 0.0
    %1463 = vmatprep.subr.mxu0 0.0
    %1464 = vmatpush1.msra.mxu0 0.0
    %1465 = vmatprep.subr.mxu0 0.0
    %1466 = vmatpush1.msra.mxu0 0.0
    %1467 = vmatprep.subr.mxu0 0.0
    %1468 = vmatpush1.msra.mxu0 0.0
    %1469 = vmatprep.subr.mxu0 0.0
    %1470 = vmatpush1.msra.mxu0 0.0
    %1471 = vmatprep.subr.mxu0 0.0
    %1472 = vmatpush1.msra.mxu0 0.0
    %1473 = vmatprep.subr.mxu0 0.0
    %1474 = vmatpush1.msra.mxu0 0.0
    %1475 = vmatprep.subr.mxu0 0.0
    %1476 = vmatpush1.msra.mxu0 0.0
    %1477 = vmatprep.subr.mxu0 0.0
    %1478 = vmatpush1.msra.mxu0 0.0
    %1479 = vmatprep.subr.mxu0 0.0
    %1480 = vmatpush1.msra.mxu0 0.0
    %1481 = vmatprep.subr.mxu0 0.0
    %1482 = vmatpush1.msra.mxu0 0.0
    %1483 = vmatprep.subr.mxu0 0.0
    %1484 = vmatpush1.msra.mxu0 0.0
    %1485 = vmatprep.subr.mxu0 0.0
    %1486 = vmatpush1.msra.mxu0 0.0
    %1487 = vmatprep.subr.mxu0 0.0
    %1488 = vmatpush1.msra.mxu0 0.0
    %1489 = vmatprep.subr.mxu0 0.0
    %1490 = vmatpush1.msra.mxu0 0.0
    %1491 = vmatprep.subr.mxu0 0.0
    %1492 = vmatpush1.msra.mxu0 0.0
    %1493 = vmatprep.subr.mxu0 0.0
    %1494 = vmatpush1.msra.mxu0 0.0
    %1495 = vmatprep.subr.mxu0 0.0
    %1496 = vmatpush1.msra.mxu0 0.0
    %1497 = vmatprep.subr.mxu0 0.0
    %1498 = vmatpush1.msra.mxu0 0.0
    %1499 = vmatprep.subr.mxu0 0.0
    %1500 = vmatpush1.msra.mxu0 0.0
    %1501 = vmatprep.subr.mxu0 0.0
    %1502 = vmatpush1.msra.mxu0 0.0
    %1503 = vmatprep.subr.mxu0 0.0
    %1504 = vmatpush1.msra.mxu0 0.0
    %1505 = vmatprep.subr.mxu0 0.0
    %1506 = vmatpush1.msra.mxu0 0.0
    %1507 = vmatprep.subr.mxu0 0.0
    %1508 = vmatpush1.msra.mxu0 0.0
    %1509 = vmatprep.subr.mxu0 0.0
    %1510 = vmatpush1.msra.mxu0 0.0
    %1511 = vmatprep.subr.mxu0 0.0
    %1512 = vmatpush1.msra.mxu0 0.0
    %1513 = vmatprep.subr.mxu0 0.0
    %1514 = vmatpush1.msra.mxu0 0.0
    %1515 = vmatprep.subr.mxu0 0.0
    %1516 = vmatpush1.msra.mxu0 0.0
    %1517 = vmatprep.mubr.f32.mxu0 0.0
    %1518 = vmatmul.mubr.f32.gmra.mrb[0].mxu0 %v1451
    %v1519 = vpop.f32.mrb[0].mxu0
    %v1520 = vadd.f32 %v1445, %v1519
    %v1521 = vpop.f32.mrb[0].mxu0
    %1522 = vdwg.mxu0
    %v1523 = vadd.f32 %v1520, %v417
    %v1524 = vxor.u32 %v1523, 2147483648
    %v1525 = vmul.f32 %v1524, 1.442695
    %v1526 = vpow.pop %v1525
    %v1527 = vadd.f32 %v1526, 1.0
    %v1528 = vrcp.pop %v1527
    %v1529 = vmul.f32 1.0, %v1528
    %v1530 = vtanh.pop %v1523
    %v1531 = vmul.f32 %v1529, %v1268
    %1533 = vrot.lane.b32.xlu0 %v1530, 64
    %v1534 = vpop.permute.xlu0 %1533
    %v1536 = vmul.f32 %v1529, %v1534
    %1538 = vrot.lane.b32.xlu0 %v1536, 32
    %v1539 = vpop.permute.xlu0 %1538
    %v1541 = vadd.f32 %v1531, %v1539
    %v1542 = vtanh.pop %v1541
    %1544 = vrot.lane.b32.xlu0 %v1542, 64
    %v1545 = vpop.permute.xlu0 %1544
    %v1547 = vmul.f32 %v1529, %v1545
    %1548 = vmatprep.subr.mxu0 0.0
    %1549 = vmatpush1.msra.mxu0 %v156
    %1550 = vmatprep.subr.mxu0 0.0
    %1551 = vmatpush1.msra.mxu0 %v157
    %1552 = vmatprep.subr.mxu0 0.0
    %1553 = vmatpush1.msra.mxu0 %v158
    %1554 = vmatprep.subr.mxu0 0.0
    %1555 = vmatpush1.msra.mxu0 %v159
    %1556 = vmatprep.subr.mxu0 0.0
    %1557 = vmatpush1.msra.mxu0 0.0
    %1558 = vmatprep.subr.mxu0 0.0
    %1559 = vmatpush1.msra.mxu0 0.0
    %1560 = vmatprep.subr.mxu0 0.0
    %1561 = vmatpush1.msra.mxu0 0.0
    %1562 = vmatprep.subr.mxu0 0.0
    %1563 = vmatpush1.msra.mxu0 0.0
    %1564 = vmatprep.subr.mxu0 0.0
    %1565 = vmatpush1.msra.mxu0 0.0
    %1566 = vmatprep.subr.mxu0 0.0
    %1567 = vmatpush1.msra.mxu0 0.0
    %1568 = vmatprep.subr.mxu0 0.0
    %1569 = vmatpush1.msra.mxu0 0.0
    %1570 = vmatprep.subr.mxu0 0.0
    %1571 = vmatpush1.msra.mxu0 0.0
    %1572 = vmatprep.subr.mxu0 0.0
    %1573 = vmatpush1.msra.mxu0 0.0
    %1574 = vmatprep.subr.mxu0 0.0
    %1575 = vmatpush1.msra.mxu0 0.0
    %1576 = vmatprep.subr.mxu0 0.0
    %1577 = vmatpush1.msra.mxu0 0.0
    %1578 = vmatprep.subr.mxu0 0.0
    %1579 = vmatpush1.msra.mxu0 0.0
    %1580 = vmatprep.subr.mxu0 0.0
    %1581 = vmatpush1.msra.mxu0 0.0
    %1582 = vmatprep.subr.mxu0 0.0
    %1583 = vmatpush1.msra.mxu0 0.0
    %1584 = vmatprep.subr.mxu0 0.0
    %1585 = vmatpush1.msra.mxu0 0.0
    %1586 = vmatprep.subr.mxu0 0.0
    %1587 = vmatpush1.msra.mxu0 0.0
    %1588 = vmatprep.subr.mxu0 0.0
    %1589 = vmatpush1.msra.mxu0 0.0
    %1590 = vmatprep.subr.mxu0 0.0
    %1591 = vmatpush1.msra.mxu0 0.0
    %1592 = vmatprep.subr.mxu0 0.0
    %1593 = vmatpush1.msra.mxu0 0.0
    %1594 = vmatprep.subr.mxu0 0.0
    %1595 = vmatpush1.msra.mxu0 0.0
    %1596 = vmatprep.subr.mxu0 0.0
    %1597 = vmatpush1.msra.mxu0 0.0
    %1598 = vmatprep.subr.mxu0 0.0
    %1599 = vmatpush1.msra.mxu0 0.0
    %1600 = vmatprep.subr.mxu0 0.0
    %1601 = vmatpush1.msra.mxu0 0.0
    %1602 = vmatprep.subr.mxu0 0.0
    %1603 = vmatpush1.msra.mxu0 0.0
    %1604 = vmatprep.subr.mxu0 0.0
    %1605 = vmatpush1.msra.mxu0 0.0
    %1606 = vmatprep.subr.mxu0 0.0
    %1607 = vmatpush1.msra.mxu0 0.0
    %1608 = vmatprep.subr.mxu0 0.0
    %1609 = vmatpush1.msra.mxu0 0.0
    %1610 = vmatprep.subr.mxu0 0.0
    %1611 = vmatpush1.msra.mxu0 0.0
    %1612 = vmatprep.mubr.f32.mxu0 0.0
    %1613 = vmatmul.mubr.f32.gmra.mrb[0].mxu0 %v1451
    %v1614 = vpop.f32.mrb[0].mxu0
    %v1615 = vadd.f32 0.0, %v1614
    %v1616 = vpop.f32.mrb[0].mxu0
    %1617 = vdwg.mxu0
    %v1619 = vrot.slane %v1615, 6
    %v1621 = vadd.f32 %v153, %v1619
    %v1622 = vxor.u32 %v1621, 2147483648
    %v1623 = vmul.f32 %v1622, 1.442695
    %v1624 = vpow.pop %v1623
    %v1625 = vadd.f32 %v1624, 1.0
    %v1626 = vrcp.pop %v1625
    %v1627 = vmul.f32 1.0, %v1626
    %v1628 = vtanh.pop %v1621
    %v1630 = vrot.slane %v1366, 6
    %v1632 = vmul.f32 %v1627, %v1630
    %1634 = vrot.lane.b32.xlu0 %v1628, 64
    %v1635 = vpop.permute.xlu0 %1634
    %v1637 = vmul.f32 %v1627, %v1635
    %1639 = vrot.lane.b32.xlu0 %v1637, 32
    %v1640 = vpop.permute.xlu0 %1639
    %v1642 = vadd.f32 %v1632, %v1640
    %v1643 = vtanh.pop %v1642
    %1645 = vrot.lane.b32.xlu0 %v1643, 64
    %v1646 = vpop.permute.xlu0 %1645
    %v1648 = vmul.f32 %v1627, %v1646
    %1650 = vrot.lane.b32.xlu0 %v1547, 32
    %v1651 = vpop.permute.xlu0 %1650
    %v1652 = vsel %vm169, %v1651, 0
    %1654 = vmatprep.subr.mxu0 0.0
    %1655 = vmatpush1.msra.mxu0 %v164
    %1656 = vmatprep.subr.mxu0 0.0
    %1657 = vmatpush1.msra.mxu0 %v165
    %1658 = vmatprep.subr.mxu0 0.0
    %1659 = vmatpush1.msra.mxu0 %v166
    %1660 = vmatprep.subr.mxu0 0.0
    %1661 = vmatpush1.msra.mxu0 %v167
    %1662 = vmatprep.subr.mxu0 0.0
    %1663 = vmatpush1.msra.mxu0 0.0
    %1664 = vmatprep.subr.mxu0 0.0
    %1665 = vmatpush1.msra.mxu0 0.0
    %1666 = vmatprep.subr.mxu0 0.0
    %1667 = vmatpush1.msra.mxu0 0.0
    %1668 = vmatprep.subr.mxu0 0.0
    %1669 = vmatpush1.msra.mxu0 0.0
    %1670 = vmatprep.subr.mxu0 0.0
    %1671 = vmatpush1.msra.mxu0 0.0
    %1672 = vmatprep.subr.mxu0 0.0
    %1673 = vmatpush1.msra.mxu0 0.0
    %1674 = vmatprep.subr.mxu0 0.0
    %1675 = vmatpush1.msra.mxu0 0.0
    %1676 = vmatprep.subr.mxu0 0.0
    %1677 = vmatpush1.msra.mxu0 0.0
    %1678 = vmatprep.subr.mxu0 0.0
    %1679 = vmatpush1.msra.mxu0 0.0
    %1680 = vmatprep.subr.mxu0 0.0
    %1681 = vmatpush1.msra.mxu0 0.0
    %1682 = vmatprep.subr.mxu0 0.0
    %1683 = vmatpush1.msra.mxu0 0.0
    %1684 = vmatprep.subr.mxu0 0.0
    %1685 = vmatpush1.msra.mxu0 0.0
    %1686 = vmatprep.subr.mxu0 0.0
    %1687 = vmatpush1.msra.mxu0 0.0
    %1688 = vmatprep.subr.mxu0 0.0
    %1689 = vmatpush1.msra.mxu0 0.0
    %1690 = vmatprep.subr.mxu0 0.0
    %1691 = vmatpush1.msra.mxu0 0.0
    %1692 = vmatprep.subr.mxu0 0.0
    %1693 = vmatpush1.msra.mxu0 0.0
    %1694 = vmatprep.subr.mxu0 0.0
    %1695 = vmatpush1.msra.mxu0 0.0
    %1696 = vmatprep.subr.mxu0 0.0
    %1697 = vmatpush1.msra.mxu0 0.0
    %1698 = vmatprep.subr.mxu0 0.0
    %1699 = vmatpush1.msra.mxu0 0.0
    %1700 = vmatprep.subr.mxu0 0.0
    %1701 = vmatpush1.msra.mxu0 0.0
    %1702 = vmatprep.subr.mxu0 0.0
    %1703 = vmatpush1.msra.mxu0 0.0
    %1704 = vmatprep.subr.mxu0 0.0
    %1705 = vmatpush1.msra.mxu0 0.0
    %1706 = vmatprep.subr.mxu0 0.0
    %1707 = vmatpush1.msra.mxu0 0.0
    %1708 = vmatprep.subr.mxu0 0.0
    %1709 = vmatpush1.msra.mxu0 0.0
    %1710 = vmatprep.subr.mxu0 0.0
    %1711 = vmatpush1.msra.mxu0 0.0
    %1712 = vmatprep.subr.mxu0 0.0
    %1713 = vmatpush1.msra.mxu0 0.0
    %1714 = vmatprep.subr.mxu0 0.0
    %1715 = vmatpush1.msra.mxu0 0.0
    %1716 = vmatprep.subr.mxu0 0.0
    %1717 = vmatpush1.msra.mxu0 0.0
    %1718 = vmatprep.mubr.f32.mxu0 0.0
    %1719 = vmatmul.mubr.f32.gmra.mrb[0].mxu0 %v1652
    %v1720 = vpop.f32.mrb[0].mxu0
    %v1721 = vadd.f32 0.0, %v1720
    %v1722 = vpop.f32.mrb[0].mxu0
    %1723 = vdwg.mxu0
    %v1725 = vrot.slane %v1648, 2
    %1726 = vrot.lane.b32.xlu0 %v1725, 32
    %v1727 = vpop.permute.xlu0 %1726
    %v1728 = vsel %vm169, %v1727, 0
    %1730 = vmatprep.subr.mxu0 0.0
    %1731 = vmatpush1.msra.mxu0 %v160
    %1732 = vmatprep.subr.mxu0 0.0
    %1733 = vmatpush1.msra.mxu0 %v161
    %1734 = vmatprep.subr.mxu0 0.0
    %1735 = vmatpush1.msra.mxu0 %v162
    %1736 = vmatprep.subr.mxu0 0.0
    %1737 = vmatpush1.msra.mxu0 %v163
    %1738 = vmatprep.subr.mxu0 0.0
    %1739 = vmatpush1.msra.mxu0 0.0
    %1740 = vmatprep.subr.mxu0 0.0
    %1741 = vmatpush1.msra.mxu0 0.0
    %1742 = vmatprep.subr.mxu0 0.0
    %1743 = vmatpush1.msra.mxu0 0.0
    %1744 = vmatprep.subr.mxu0 0.0
    %1745 = vmatpush1.msra.mxu0 0.0
    %1746 = vmatprep.subr.mxu0 0.0
    %1747 = vmatpush1.msra.mxu0 0.0
    %1748 = vmatprep.subr.mxu0 0.0
    %1749 = vmatpush1.msra.mxu0 0.0
    %1750 = vmatprep.subr.mxu0 0.0
    %1751 = vmatpush1.msra.mxu0 0.0
    %1752 = vmatprep.subr.mxu0 0.0
    %1753 = vmatpush1.msra.mxu0 0.0
    %1754 = vmatprep.subr.mxu0 0.0
    %1755 = vmatpush1.msra.mxu0 0.0
    %1756 = vmatprep.subr.mxu0 0.0
    %1757 = vmatpush1.msra.mxu0 0.0
    %1758 = vmatprep.subr.mxu0 0.0
    %1759 = vmatpush1.msra.mxu0 0.0
    %1760 = vmatprep.subr.mxu0 0.0
    %1761 = vmatpush1.msra.mxu0 0.0
    %1762 = vmatprep.subr.mxu0 0.0
    %1763 = vmatpush1.msra.mxu0 0.0
    %1764 = vmatprep.subr.mxu0 0.0
    %1765 = vmatpush1.msra.mxu0 0.0
    %1766 = vmatprep.subr.mxu0 0.0
    %1767 = vmatpush1.msra.mxu0 0.0
    %1768 = vmatprep.subr.mxu0 0.0
    %1769 = vmatpush1.msra.mxu0 0.0
    %1770 = vmatprep.subr.mxu0 0.0
    %1771 = vmatpush1.msra.mxu0 0.0
    %1772 = vmatprep.subr.mxu0 0.0
    %1773 = vmatpush1.msra.mxu0 0.0
    %1774 = vmatprep.subr.mxu0 0.0
    %1775 = vmatpush1.msra.mxu0 0.0
    %1776 = vmatprep.subr.mxu0 0.0
    %1777 = vmatpush1.msra.mxu0 0.0
    %1778 = vmatprep.subr.mxu0 0.0
    %1779 = vmatpush1.msra.mxu0 0.0
    %1780 = vmatprep.subr.mxu0 0.0
    %1781 = vmatpush1.msra.mxu0 0.0
    %1782 = vmatprep.subr.mxu0 0.0
    %1783 = vmatpush1.msra.mxu0 0.0
    %1784 = vmatprep.subr.mxu0 0.0
    %1785 = vmatpush1.msra.mxu0 0.0
    %1786 = vmatprep.subr.mxu0 0.0
    %1787 = vmatpush1.msra.mxu0 0.0
    %1788 = vmatprep.subr.mxu0 0.0
    %1789 = vmatpush1.msra.mxu0 0.0
    %1790 = vmatprep.subr.mxu0 0.0
    %1791 = vmatpush1.msra.mxu0 0.0
    %1792 = vmatprep.subr.mxu0 0.0
    %1793 = vmatpush1.msra.mxu0 0.0
    %1794 = vmatprep.mubr.f32.mxu0 0.0
    %1795 = vmatmul.mubr.f32.gmra.mrb[0].mxu0 %v1728
    %v1796 = vpop.f32.mrb[0].mxu0
    %v1797 = vadd.f32 %v1721, %v1796
    %v1798 = vpop.f32.mrb[0].mxu0
    %1799 = vdwg.mxu0
    %v1800 = vadd.f32 %v1797, %v417
    %v1801 = vxor.u32 %v1800, 2147483648
    %v1802 = vmul.f32 %v1801, 1.442695
    %v1803 = vpow.pop %v1802
    %v1804 = vadd.f32 %v1803, 1.0
    %v1805 = vrcp.pop %v1804
    %v1806 = vmul.f32 1.0, %v1805
    %v1807 = vtanh.pop %v1800
    %v1808 = vmul.f32 %v1806, %v1541
    %1810 = vrot.lane.b32.xlu0 %v1807, 64
    %v1811 = vpop.permute.xlu0 %1810
    %v1813 = vmul.f32 %v1806, %v1811
    %1815 = vrot.lane.b32.xlu0 %v1813, 32
    %v1816 = vpop.permute.xlu0 %1815
    %v1818 = vadd.f32 %v1808, %v1816
    %v1819 = vtanh.pop %v1818
    %1821 = vrot.lane.b32.xlu0 %v1819, 64
    %v1822 = vpop.permute.xlu0 %1821
    %v1824 = vmul.f32 %v1806, %v1822
    %1825 = vmatprep.subr.mxu0 0.0
    %1826 = vmatpush1.msra.mxu0 %v156
    %1827 = vmatprep.subr.mxu0 0.0
    %1828 = vmatpush1.msra.mxu0 %v157
    %1829 = vmatprep.subr.mxu0 0.0
    %1830 = vmatpush1.msra.mxu0 %v158
    %1831 = vmatprep.subr.mxu0 0.0
    %1832 = vmatpush1.msra.mxu0 %v159
    %1833 = vmatprep.subr.mxu0 0.0
    %1834 = vmatpush1.msra.mxu0 0.0
    %1835 = vmatprep.subr.mxu0 0.0
    %1836 = vmatpush1.msra.mxu0 0.0
    %1837 = vmatprep.subr.mxu0 0.0
    %1838 = vmatpush1.msra.mxu0 0.0
    %1839 = vmatprep.subr.mxu0 0.0
    %1840 = vmatpush1.msra.mxu0 0.0
    %1841 = vmatprep.subr.mxu0 0.0
    %1842 = vmatpush1.msra.mxu0 0.0
    %1843 = vmatprep.subr.mxu0 0.0
    %1844 = vmatpush1.msra.mxu0 0.0
    %1845 = vmatprep.subr.mxu0 0.0
    %1846 = vmatpush1.msra.mxu0 0.0
    %1847 = vmatprep.subr.mxu0 0.0
    %1848 = vmatpush1.msra.mxu0 0.0
    %1849 = vmatprep.subr.mxu0 0.0
    %1850 = vmatpush1.msra.mxu0 0.0
    %1851 = vmatprep.subr.mxu0 0.0
    %1852 = vmatpush1.msra.mxu0 0.0
    %1853 = vmatprep.subr.mxu0 0.0
    %1854 = vmatpush1.msra.mxu0 0.0
    %1855 = vmatprep.subr.mxu0 0.0
    %1856 = vmatpush1.msra.mxu0 0.0
    %1857 = vmatprep.subr.mxu0 0.0
    %1858 = vmatpush1.msra.mxu0 0.0
    %1859 = vmatprep.subr.mxu0 0.0
    %1860 = vmatpush1.msra.mxu0 0.0
    %1861 = vmatprep.subr.mxu0 0.0
    %1862 = vmatpush1.msra.mxu0 0.0
    %1863 = vmatprep.subr.mxu0 0.0
    %1864 = vmatpush1.msra.mxu0 0.0
    %1865 = vmatprep.subr.mxu0 0.0
    %1866 = vmatpush1.msra.mxu0 0.0
    %1867 = vmatprep.subr.mxu0 0.0
    %1868 = vmatpush1.msra.mxu0 0.0
    %1869 = vmatprep.subr.mxu0 0.0
    %1870 = vmatpush1.msra.mxu0 0.0
    %1871 = vmatprep.subr.mxu0 0.0
    %1872 = vmatpush1.msra.mxu0 0.0
    %1873 = vmatprep.subr.mxu0 0.0
    %1874 = vmatpush1.msra.mxu0 0.0
    %1875 = vmatprep.subr.mxu0 0.0
    %1876 = vmatpush1.msra.mxu0 0.0
    %1877 = vmatprep.subr.mxu0 0.0
    %1878 = vmatpush1.msra.mxu0 0.0
    %1879 = vmatprep.subr.mxu0 0.0
    %1880 = vmatpush1.msra.mxu0 0.0
    %1881 = vmatprep.subr.mxu0 0.0
    %1882 = vmatpush1.msra.mxu0 0.0
    %1883 = vmatprep.subr.mxu0 0.0
    %1884 = vmatpush1.msra.mxu0 0.0
    %1885 = vmatprep.subr.mxu0 0.0
    %1886 = vmatpush1.msra.mxu0 0.0
    %1887 = vmatprep.subr.mxu0 0.0
    %1888 = vmatpush1.msra.mxu0 0.0
    %1889 = vmatprep.mubr.f32.mxu0 0.0
    %1890 = vmatmul.mubr.f32.gmra.mrb[0].mxu0 %v1728
    %v1891 = vpop.f32.mrb[0].mxu0
    %v1892 = vadd.f32 0.0, %v1891
    %v1893 = vpop.f32.mrb[0].mxu0
    %1894 = vdwg.mxu0
    %v1896 = vrot.slane %v1892, 4
    %v1898 = vadd.f32 %v153, %v1896
    %v1899 = vxor.u32 %v1898, 2147483648
    %v1900 = vmul.f32 %v1899, 1.442695
    %v1901 = vpow.pop %v1900
    %v1902 = vadd.f32 %v1901, 1.0
    %v1903 = vrcp.pop %v1902
    %v1904 = vmul.f32 1.0, %v1903
    %v1905 = vtanh.pop %v1898
    %v1907 = vrot.slane %v1642, 6
    %v1909 = vmul.f32 %v1904, %v1907
    %1911 = vrot.lane.b32.xlu0 %v1905, 64
    %v1912 = vpop.permute.xlu0 %1911
    %v1914 = vmul.f32 %v1904, %v1912
    %1916 = vrot.lane.b32.xlu0 %v1914, 32
    %v1917 = vpop.permute.xlu0 %1916
    %v1919 = vadd.f32 %v1909, %v1917
    %v1920 = vtanh.pop %v1919
    %1922 = vrot.lane.b32.xlu0 %v1920, 64
    %v1923 = vpop.permute.xlu0 %1922
    %v1925 = vmul.f32 %v1904, %v1923
    %1927 = vrot.lane.b32.xlu0 %v1824, 32
    %v1928 = vpop.permute.xlu0 %1927
    %v1929 = vsel %vm169, %v1928, 0
    %1931 = vmatprep.subr.mxu0 0.0
    %1932 = vmatpush1.msra.mxu0 %v164
    %1933 = vmatprep.subr.mxu0 0.0
    %1934 = vmatpush1.msra.mxu0 %v165
    %1935 = vmatprep.subr.mxu0 0.0
    %1936 = vmatpush1.msra.mxu0 %v166
    %1937 = vmatprep.subr.mxu0 0.0
    %1938 = vmatpush1.msra.mxu0 %v167
    %1939 = vmatprep.subr.mxu0 0.0
    %1940 = vmatpush1.msra.mxu0 0.0
    %1941 = vmatprep.subr.mxu0 0.0
    %1942 = vmatpush1.msra.mxu0 0.0
    %1943 = vmatprep.subr.mxu0 0.0
    %1944 = vmatpush1.msra.mxu0 0.0
    %1945 = vmatprep.subr.mxu0 0.0
    %1946 = vmatpush1.msra.mxu0 0.0
    %1947 = vmatprep.subr.mxu0 0.0
    %1948 = vmatpush1.msra.mxu0 0.0
    %1949 = vmatprep.subr.mxu0 0.0
    %1950 = vmatpush1.msra.mxu0 0.0
    %1951 = vmatprep.subr.mxu0 0.0
    %1952 = vmatpush1.msra.mxu0 0.0
    %1953 = vmatprep.subr.mxu0 0.0
    %1954 = vmatpush1.msra.mxu0 0.0
    %1955 = vmatprep.subr.mxu0 0.0
    %1956 = vmatpush1.msra.mxu0 0.0
    %1957 = vmatprep.subr.mxu0 0.0
    %1958 = vmatpush1.msra.mxu0 0.0
    %1959 = vmatprep.subr.mxu0 0.0
    %1960 = vmatpush1.msra.mxu0 0.0
    %1961 = vmatprep.subr.mxu0 0.0
    %1962 = vmatpush1.msra.mxu0 0.0
    %1963 = vmatprep.subr.mxu0 0.0
    %1964 = vmatpush1.msra.mxu0 0.0
    %1965 = vmatprep.subr.mxu0 0.0
    %1966 = vmatpush1.msra.mxu0 0.0
    %1967 = vmatprep.subr.mxu0 0.0
    %1968 = vmatpush1.msra.mxu0 0.0
    %1969 = vmatprep.subr.mxu0 0.0
    %1970 = vmatpush1.msra.mxu0 0.0
    %1971 = vmatprep.subr.mxu0 0.0
    %1972 = vmatpush1.msra.mxu0 0.0
    %1973 = vmatprep.subr.mxu0 0.0
    %1974 = vmatpush1.msra.mxu0 0.0
    %1975 = vmatprep.subr.mxu0 0.0
    %1976 = vmatpush1.msra.mxu0 0.0
    %1977 = vmatprep.subr.mxu0 0.0
    %1978 = vmatpush1.msra.mxu0 0.0
    %1979 = vmatprep.subr.mxu0 0.0
    %1980 = vmatpush1.msra.mxu0 0.0
    %1981 = vmatprep.subr.mxu0 0.0
    %1982 = vmatpush1.msra.mxu0 0.0
    %1983 = vmatprep.subr.mxu0 0.0
    %1984 = vmatpush1.msra.mxu0 0.0
    %1985 = vmatprep.subr.mxu0 0.0
    %1986 = vmatpush1.msra.mxu0 0.0
    %1987 = vmatprep.subr.mxu0 0.0
    %1988 = vmatpush1.msra.mxu0 0.0
    %1989 = vmatprep.subr.mxu0 0.0
    %1990 = vmatpush1.msra.mxu0 0.0
    %1991 = vmatprep.subr.mxu0 0.0
    %1992 = vmatpush1.msra.mxu0 0.0
    %1993 = vmatprep.subr.mxu0 0.0
    %1994 = vmatpush1.msra.mxu0 0.0
    %1995 = vmatprep.mubr.f32.mxu0 0.0
    %1996 = vmatmul.mubr.f32.gmra.mrb[0].mxu0 %v1929
    %v1997 = vpop.f32.mrb[0].mxu0
    %v1998 = vadd.f32 0.0, %v1997
    %v1999 = vpop.f32.mrb[0].mxu0
    %2000 = vdwg.mxu0
    %v2002 = vrot.slane %v1925, 4
    %2003 = vrot.lane.b32.xlu0 %v2002, 32
    %v2004 = vpop.permute.xlu0 %2003
    %v2005 = vsel %vm169, %v2004, 0
    %2007 = vmatprep.subr.mxu0 0.0
    %2008 = vmatpush1.msra.mxu0 %v160
    %2009 = vmatprep.subr.mxu0 0.0
    %2010 = vmatpush1.msra.mxu0 %v161
    %2011 = vmatprep.subr.mxu0 0.0
    %2012 = vmatpush1.msra.mxu0 %v162
    %2013 = vmatprep.subr.mxu0 0.0
    %2014 = vmatpush1.msra.mxu0 %v163
    %2015 = vmatprep.subr.mxu0 0.0
    %2016 = vmatpush1.msra.mxu0 0.0
    %2017 = vmatprep.subr.mxu0 0.0
    %2018 = vmatpush1.msra.mxu0 0.0
    %2019 = vmatprep.subr.mxu0 0.0
    %2020 = vmatpush1.msra.mxu0 0.0
    %2021 = vmatprep.subr.mxu0 0.0
    %2022 = vmatpush1.msra.mxu0 0.0
    %2023 = vmatprep.subr.mxu0 0.0
    %2024 = vmatpush1.msra.mxu0 0.0
    %2025 = vmatprep.subr.mxu0 0.0
    %2026 = vmatpush1.msra.mxu0 0.0
    %2027 = vmatprep.subr.mxu0 0.0
    %2028 = vmatpush1.msra.mxu0 0.0
    %2029 = vmatprep.subr.mxu0 0.0
    %2030 = vmatpush1.msra.mxu0 0.0
    %2031 = vmatprep.subr.mxu0 0.0
    %2032 = vmatpush1.msra.mxu0 0.0
    %2033 = vmatprep.subr.mxu0 0.0
    %2034 = vmatpush1.msra.mxu0 0.0
    %2035 = vmatprep.subr.mxu0 0.0
    %2036 = vmatpush1.msra.mxu0 0.0
    %2037 = vmatprep.subr.mxu0 0.0
    %2038 = vmatpush1.msra.mxu0 0.0
    %2039 = vmatprep.subr.mxu0 0.0
    %2040 = vmatpush1.msra.mxu0 0.0
    %2041 = vmatprep.subr.mxu0 0.0
    %2042 = vmatpush1.msra.mxu0 0.0
    %2043 = vmatprep.subr.mxu0 0.0
    %2044 = vmatpush1.msra.mxu0 0.0
    %2045 = vmatprep.subr.mxu0 0.0
    %2046 = vmatpush1.msra.mxu0 0.0
    %2047 = vmatprep.subr.mxu0 0.0
    %2048 = vmatpush1.msra.mxu0 0.0
    %2049 = vmatprep.subr.mxu0 0.0
    %2050 = vmatpush1.msra.mxu0 0.0
    %2051 = vmatprep.subr.mxu0 0.0
    %2052 = vmatpush1.msra.mxu0 0.0
    %2053 = vmatprep.subr.mxu0 0.0
    %2054 = vmatpush1.msra.mxu0 0.0
    %2055 = vmatprep.subr.mxu0 0.0
    %2056 = vmatpush1.msra.mxu0 0.0
    %2057 = vmatprep.subr.mxu0 0.0
    %2058 = vmatpush1.msra.mxu0 0.0
    %2059 = vmatprep.subr.mxu0 0.0
    %2060 = vmatpush1.msra.mxu0 0.0
    %2061 = vmatprep.subr.mxu0 0.0
    %2062 = vmatpush1.msra.mxu0 0.0
    %2063 = vmatprep.subr.mxu0 0.0
    %2064 = vmatpush1.msra.mxu0 0.0
    %2065 = vmatprep.subr.mxu0 0.0
    %2066 = vmatpush1.msra.mxu0 0.0
    %2067 = vmatprep.subr.mxu0 0.0
    %2068 = vmatpush1.msra.mxu0 0.0
    %2069 = vmatprep.subr.mxu0 0.0
    %2070 = vmatpush1.msra.mxu0 0.0
    %2071 = vmatprep.mubr.f32.mxu0 0.0
    %2072 = vmatmul.mubr.f32.gmra.mrb[0].mxu0 %v2005
    %v2073 = vpop.f32.mrb[0].mxu0
    %v2074 = vadd.f32 %v1998, %v2073
    %v2075 = vpop.f32.mrb[0].mxu0
    %2076 = vdwg.mxu0
    %v2077 = vadd.f32 %v2074, %v417
    %v2078 = vxor.u32 %v2077, 2147483648
    %v2079 = vmul.f32 %v2078, 1.442695
    %v2080 = vpow.pop %v2079
    %v2081 = vadd.f32 %v2080, 1.0
    %v2082 = vrcp.pop %v2081
    %v2083 = vmul.f32 1.0, %v2082
    %v2084 = vtanh.pop %v2077
    %v2085 = vmul.f32 %v2083, %v1818
    %2087 = vrot.lane.b32.xlu0 %v2084, 64
    %v2088 = vpop.permute.xlu0 %2087
    %v2090 = vmul.f32 %v2083, %v2088
    %2092 = vrot.lane.b32.xlu0 %v2090, 32
    %v2093 = vpop.permute.xlu0 %2092
    %v2095 = vadd.f32 %v2085, %v2093
    %v2096 = vtanh.pop %v2095
    %2098 = vrot.lane.b32.xlu0 %v2096, 64
    %v2099 = vpop.permute.xlu0 %2098
    %v2101 = vmul.f32 %v2083, %v2099
    %2102 = vmatprep.subr.mxu0 0.0
    %2103 = vmatpush1.msra.mxu0 %v156
    %2104 = vmatprep.subr.mxu0 0.0
    %2105 = vmatpush1.msra.mxu0 %v157
    %2106 = vmatprep.subr.mxu0 0.0
    %2107 = vmatpush1.msra.mxu0 %v158
    %2108 = vmatprep.subr.mxu0 0.0
    %2109 = vmatpush1.msra.mxu0 %v159
    %2110 = vmatprep.subr.mxu0 0.0
    %2111 = vmatpush1.msra.mxu0 0.0
    %2112 = vmatprep.subr.mxu0 0.0
    %2113 = vmatpush1.msra.mxu0 0.0
    %2114 = vmatprep.subr.mxu0 0.0
    %2115 = vmatpush1.msra.mxu0 0.0
    %2116 = vmatprep.subr.mxu0 0.0
    %2117 = vmatpush1.msra.mxu0 0.0
    %2118 = vmatprep.subr.mxu0 0.0
    %2119 = vmatpush1.msra.mxu0 0.0
    %2120 = vmatprep.subr.mxu0 0.0
    %2121 = vmatpush1.msra.mxu0 0.0
    %2122 = vmatprep.subr.mxu0 0.0
    %2123 = vmatpush1.msra.mxu0 0.0
    %2124 = vmatprep.subr.mxu0 0.0
    %2125 = vmatpush1.msra.mxu0 0.0
    %2126 = vmatprep.subr.mxu0 0.0
    %2127 = vmatpush1.msra.mxu0 0.0
    %2128 = vmatprep.subr.mxu0 0.0
    %2129 = vmatpush1.msra.mxu0 0.0
    %2130 = vmatprep.subr.mxu0 0.0
    %2131 = vmatpush1.msra.mxu0 0.0
    %2132 = vmatprep.subr.mxu0 0.0
    %2133 = vmatpush1.msra.mxu0 0.0
    %2134 = vmatprep.subr.mxu0 0.0
    %2135 = vmatpush1.msra.mxu0 0.0
    %2136 = vmatprep.subr.mxu0 0.0
    %2137 = vmatpush1.msra.mxu0 0.0
    %2138 = vmatprep.subr.mxu0 0.0
    %2139 = vmatpush1.msra.mxu0 0.0
    %2140 = vmatprep.subr.mxu0 0.0
    %2141 = vmatpush1.msra.mxu0 0.0
    %2142 = vmatprep.subr.mxu0 0.0
    %2143 = vmatpush1.msra.mxu0 0.0
    %2144 = vmatprep.subr.mxu0 0.0
    %2145 = vmatpush1.msra.mxu0 0.0
    %2146 = vmatprep.subr.mxu0 0.0
    %2147 = vmatpush1.msra.mxu0 0.0
    %2148 = vmatprep.subr.mxu0 0.0
    %2149 = vmatpush1.msra.mxu0 0.0
    %2150 = vmatprep.subr.mxu0 0.0
    %2151 = vmatpush1.msra.mxu0 0.0
    %2152 = vmatprep.subr.mxu0 0.0
    %2153 = vmatpush1.msra.mxu0 0.0
    %2154 = vmatprep.subr.mxu0 0.0
    %2155 = vmatpush1.msra.mxu0 0.0
    %2156 = vmatprep.subr.mxu0 0.0
    %2157 = vmatpush1.msra.mxu0 0.0
    %2158 = vmatprep.subr.mxu0 0.0
    %2159 = vmatpush1.msra.mxu0 0.0
    %2160 = vmatprep.subr.mxu0 0.0
    %2161 = vmatpush1.msra.mxu0 0.0
    %2162 = vmatprep.subr.mxu0 0.0
    %2163 = vmatpush1.msra.mxu0 0.0
    %2164 = vmatprep.subr.mxu0 0.0
    %2165 = vmatpush1.msra.mxu0 0.0
    %2166 = vmatprep.mubr.f32.mxu0 0.0
    %2167 = vmatmul.mubr.f32.gmra.mrb[0].mxu0 %v2005
    %v2168 = vpop.f32.mrb[0].mxu0
    %v2169 = vadd.f32 0.0, %v2168
    %v2170 = vpop.f32.mrb[0].mxu0
    %2171 = vdwg.mxu0
    %v2173 = vrot.slane %v2169, 2
    %v2175 = vadd.f32 %v153, %v2173
    %v2176 = vxor.u32 %v2175, 2147483648
    %v2177 = vmul.f32 %v2176, 1.442695
    %v2178 = vpow.pop %v2177
    %v2179 = vadd.f32 %v2178, 1.0
    %v2180 = vrcp.pop %v2179
    %v2181 = vmul.f32 1.0, %v2180
    %v2182 = vtanh.pop %v2175
    %v2184 = vrot.slane %v1919, 6
    %v2186 = vmul.f32 %v2181, %v2184
    %2188 = vrot.lane.b32.xlu0 %v2182, 64
    %v2189 = vpop.permute.xlu0 %2188
    %v2191 = vmul.f32 %v2181, %v2189
    %2193 = vrot.lane.b32.xlu0 %v2191, 32
    %v2194 = vpop.permute.xlu0 %2193
    %v2196 = vadd.f32 %v2186, %v2194
    %v2197 = vtanh.pop %v2196
    %2199 = vrot.lane.b32.xlu0 %v2197, 64
    %v2200 = vpop.permute.xlu0 %2199
    %v2202 = vmul.f32 %v2181, %v2200
    %2204 = vrot.lane.b32.xlu0 %v2101, 32
    %v2205 = vpop.permute.xlu0 %2204
    %v2206 = vsel %vm169, %v2205, 0
    %2208 = vmatprep.subr.mxu0 0.0
    %2209 = vmatpush1.msra.mxu0 %v164
    %2210 = vmatprep.subr.mxu0 0.0
    %2211 = vmatpush1.msra.mxu0 %v165
    %2212 = vmatprep.subr.mxu0 0.0
    %2213 = vmatpush1.msra.mxu0 %v166
    %2214 = vmatprep.subr.mxu0 0.0
    %2215 = vmatpush1.msra.mxu0 %v167
    %2216 = vmatprep.subr.mxu0 0.0
    %2217 = vmatpush1.msra.mxu0 0.0
    %2218 = vmatprep.subr.mxu0 0.0
    %2219 = vmatpush1.msra.mxu0 0.0
    %2220 = vmatprep.subr.mxu0 0.0
    %2221 = vmatpush1.msra.mxu0 0.0
    %2222 = vmatprep.subr.mxu0 0.0
    %2223 = vmatpush1.msra.mxu0 0.0
    %2224 = vmatprep.subr.mxu0 0.0
    %2225 = vmatpush1.msra.mxu0 0.0
    %2226 = vmatprep.subr.mxu0 0.0
    %2227 = vmatpush1.msra.mxu0 0.0
    %2228 = vmatprep.subr.mxu0 0.0
    %2229 = vmatpush1.msra.mxu0 0.0
    %2230 = vmatprep.subr.mxu0 0.0
    %2231 = vmatpush1.msra.mxu0 0.0
    %2232 = vmatprep.subr.mxu0 0.0
    %2233 = vmatpush1.msra.mxu0 0.0
    %2234 = vmatprep.subr.mxu0 0.0
    %2235 = vmatpush1.msra.mxu0 0.0
    %2236 = vmatprep.subr.mxu0 0.0
    %2237 = vmatpush1.msra.mxu0 0.0
    %2238 = vmatprep.subr.mxu0 0.0
    %2239 = vmatpush1.msra.mxu0 0.0
    %2240 = vmatprep.subr.mxu0 0.0
    %2241 = vmatpush1.msra.mxu0 0.0
    %2242 = vmatprep.subr.mxu0 0.0
    %2243 = vmatpush1.msra.mxu0 0.0
    %2244 = vmatprep.subr.mxu0 0.0
    %2245 = vmatpush1.msra.mxu0 0.0
    %2246 = vmatprep.subr.mxu0 0.0
    %2247 = vmatpush1.msra.mxu0 0.0
    %2248 = vmatprep.subr.mxu0 0.0
    %2249 = vmatpush1.msra.mxu0 0.0
    %2250 = vmatprep.subr.mxu0 0.0
    %2251 = vmatpush1.msra.mxu0 0.0
    %2252 = vmatprep.subr.mxu0 0.0
    %2253 = vmatpush1.msra.mxu0 0.0
    %2254 = vmatprep.subr.mxu0 0.0
    %2255 = vmatpush1.msra.mxu0 0.0
    %2256 = vmatprep.subr.mxu0 0.0
    %2257 = vmatpush1.msra.mxu0 0.0
    %2258 = vmatprep.subr.mxu0 0.0
    %2259 = vmatpush1.msra.mxu0 0.0
    %2260 = vmatprep.subr.mxu0 0.0
    %2261 = vmatpush1.msra.mxu0 0.0
    %2262 = vmatprep.subr.mxu0 0.0
    %2263 = vmatpush1.msra.mxu0 0.0
    %2264 = vmatprep.subr.mxu0 0.0
    %2265 = vmatpush1.msra.mxu0 0.0
    %2266 = vmatprep.subr.mxu0 0.0
    %2267 = vmatpush1.msra.mxu0 0.0
    %2268 = vmatprep.subr.mxu0 0.0
    %2269 = vmatpush1.msra.mxu0 0.0
    %2270 = vmatprep.subr.mxu0 0.0
    %2271 = vmatpush1.msra.mxu0 0.0
    %2272 = vmatprep.mubr.f32.mxu0 0.0
    %2273 = vmatmul.mubr.f32.gmra.mrb[0].mxu0 %v2206
    %v2274 = vpop.f32.mrb[0].mxu0
    %v2275 = vadd.f32 0.0, %v2274
    %v2276 = vpop.f32.mrb[0].mxu0
    %2277 = vdwg.mxu0
    %v2279 = vrot.slane %v2202, 6
    %2280 = vrot.lane.b32.xlu0 %v2279, 32
    %v2281 = vpop.permute.xlu0 %2280
    %v2282 = vsel %vm169, %v2281, 0
    %2284 = vmatprep.subr.mxu0 0.0
    %2285 = vmatpush1.msra.mxu0 %v160
    %2286 = vmatprep.subr.mxu0 0.0
    %2287 = vmatpush1.msra.mxu0 %v161
    %2288 = vmatprep.subr.mxu0 0.0
    %2289 = vmatpush1.msra.mxu0 %v162
    %2290 = vmatprep.subr.mxu0 0.0
    %2291 = vmatpush1.msra.mxu0 %v163
    %2292 = vmatprep.subr.mxu0 0.0
    %2293 = vmatpush1.msra.mxu0 0.0
    %2294 = vmatprep.subr.mxu0 0.0
    %2295 = vmatpush1.msra.mxu0 0.0
    %2296 = vmatprep.subr.mxu0 0.0
    %2297 = vmatpush1.msra.mxu0 0.0
    %2298 = vmatprep.subr.mxu0 0.0
    %2299 = vmatpush1.msra.mxu0 0.0
    %2300 = vmatprep.subr.mxu0 0.0
    %2301 = vmatpush1.msra.mxu0 0.0
    %2302 = vmatprep.subr.mxu0 0.0
    %2303 = vmatpush1.msra.mxu0 0.0
    %2304 = vmatprep.subr.mxu0 0.0
    %2305 = vmatpush1.msra.mxu0 0.0
    %2306 = vmatprep.subr.mxu0 0.0
    %2307 = vmatpush1.msra.mxu0 0.0
    %2308 = vmatprep.subr.mxu0 0.0
    %2309 = vmatpush1.msra.mxu0 0.0
    %2310 = vmatprep.subr.mxu0 0.0
    %2311 = vmatpush1.msra.mxu0 0.0
    %2312 = vmatprep.subr.mxu0 0.0
    %2313 = vmatpush1.msra.mxu0 0.0
    %2314 = vmatprep.subr.mxu0 0.0
    %2315 = vmatpush1.msra.mxu0 0.0
    %2316 = vmatprep.subr.mxu0 0.0
    %2317 = vmatpush1.msra.mxu0 0.0
    %2318 = vmatprep.subr.mxu0 0.0
    %2319 = vmatpush1.msra.mxu0 0.0
    %2320 = vmatprep.subr.mxu0 0.0
    %2321 = vmatpush1.msra.mxu0 0.0
    %2322 = vmatprep.subr.mxu0 0.0
    %2323 = vmatpush1.msra.mxu0 0.0
    %2324 = vmatprep.subr.mxu0 0.0
    %2325 = vmatpush1.msra.mxu0 0.0
    %2326 = vmatprep.subr.mxu0 0.0
    %2327 = vmatpush1.msra.mxu0 0.0
    %2328 = vmatprep.subr.mxu0 0.0
    %2329 = vmatpush1.msra.mxu0 0.0
    %2330 = vmatprep.subr.mxu0 0.0
    %2331 = vmatpush1.msra.mxu0 0.0
    %2332 = vmatprep.subr.mxu0 0.0
    %2333 = vmatpush1.msra.mxu0 0.0
    %2334 = vmatprep.subr.mxu0 0.0
    %2335 = vmatpush1.msra.mxu0 0.0
    %2336 = vmatprep.subr.mxu0 0.0
    %2337 = vmatpush1.msra.mxu0 0.0
    %2338 = vmatprep.subr.mxu0 0.0
    %2339 = vmatpush1.msra.mxu0 0.0
    %2340 = vmatprep.subr.mxu0 0.0
    %2341 = vmatpush1.msra.mxu0 0.0
    %2342 = vmatprep.subr.mxu0 0.0
    %2343 = vmatpush1.msra.mxu0 0.0
    %2344 = vmatprep.subr.mxu0 0.0
    %2345 = vmatpush1.msra.mxu0 0.0
    %2346 = vmatprep.subr.mxu0 0.0
    %2347 = vmatpush1.msra.mxu0 0.0
    %2348 = vmatprep.mubr.f32.mxu0 0.0
    %2349 = vmatmul.mubr.f32.gmra.mrb[0].mxu0 %v2282
    %v2350 = vpop.f32.mrb[0].mxu0
    %v2351 = vadd.f32 %v2275, %v2350
    %v2352 = vpop.f32.mrb[0].mxu0
    %2353 = vdwg.mxu0
    %v2354 = vadd.f32 %v2351, %v417
    %v2355 = vxor.u32 %v2354, 2147483648
    %v2356 = vmul.f32 %v2355, 1.442695
    %v2357 = vpow.pop %v2356
    %v2358 = vadd.f32 %v2357, 1.0
    %v2359 = vrcp.pop %v2358
    %v2360 = vmul.f32 1.0, %v2359
    %v2361 = vtanh.pop %v2354
    %v2362 = vmul.f32 %v2360, %v2095
    %2364 = vrot.lane.b32.xlu0 %v2361, 64
    %v2365 = vpop.permute.xlu0 %2364
    %v2367 = vmul.f32 %v2360, %v2365
    %2369 = vrot.lane.b32.xlu0 %v2367, 32
    %v2370 = vpop.permute.xlu0 %2369
    %v2372 = vadd.f32 %v2362, %v2370
    %v2373 = vtanh.pop %v2372
    %2375 = vrot.lane.b32.xlu0 %v2373, 64
    %v2376 = vpop.permute.xlu0 %2375
    %v2378 = vmul.f32 %v2360, %v2376
    %v2379 = vld [vmem:[%s7] sm:$0xff]
    %v2380 = vld [vmem:[%s7 + $0x8] sm:$0xff]
    %v2381 = vld [vmem:[%s7 + $0x10] sm:$0xff]
    %v2382 = vld [vmem:[%s7 + $0x18] sm:$0xff]
    %v2383 = vld [vmem:[#allocation2] sm:$0x1]
    %v2385 = vlaneseq
    %v2386 = vshrl.u32 %v2385, 7
    %v2387 = vsub.s32 0, %v2386
    %v2388 = vrot.slane %v2383, %v2387
    %2391 = vrot.lane.b32.xlu0 %v2378, 32
    %v2392 = vpop.permute.xlu0 %2391
    %v2393 = vsel %vm169, %v2392, 0
    %2395 = vmatprep.subr.mxu0 0.0
    %2396 = vmatpush1.msra.mxu0 %v2379
    %2397 = vmatprep.subr.mxu0 0.0
    %2398 = vmatpush1.msra.mxu0 %v2380
    %2399 = vmatprep.subr.mxu0 0.0
    %2400 = vmatpush1.msra.mxu0 %v2381
    %2401 = vmatprep.subr.mxu0 0.0
    %2402 = vmatpush1.msra.mxu0 %v2382
    %2403 = vmatprep.subr.mxu0 0.0
    %2404 = vmatpush1.msra.mxu0 0.0
    %2405 = vmatprep.subr.mxu0 0.0
    %2406 = vmatpush1.msra.mxu0 0.0
    %2407 = vmatprep.subr.mxu0 0.0
    %2408 = vmatpush1.msra.mxu0 0.0
    %2409 = vmatprep.subr.mxu0 0.0
    %2410 = vmatpush1.msra.mxu0 0.0
    %2411 = vmatprep.subr.mxu0 0.0
    %2412 = vmatpush1.msra.mxu0 0.0
    %2413 = vmatprep.subr.mxu0 0.0
    %2414 = vmatpush1.msra.mxu0 0.0
    %2415 = vmatprep.subr.mxu0 0.0
    %2416 = vmatpush1.msra.mxu0 0.0
    %2417 = vmatprep.subr.mxu0 0.0
    %2418 = vmatpush1.msra.mxu0 0.0
    %2419 = vmatprep.subr.mxu0 0.0
    %2420 = vmatpush1.msra.mxu0 0.0
    %2421 = vmatprep.subr.mxu0 0.0
    %2422 = vmatpush1.msra.mxu0 0.0
    %2423 = vmatprep.subr.mxu0 0.0
    %2424 = vmatpush1.msra.mxu0 0.0
    %2425 = vmatprep.subr.mxu0 0.0
    %2426 = vmatpush1.msra.mxu0 0.0
    %2427 = vmatprep.subr.mxu0 0.0
    %2428 = vmatpush1.msra.mxu0 0.0
    %2429 = vmatprep.subr.mxu0 0.0
    %2430 = vmatpush1.msra.mxu0 0.0
    %2431 = vmatprep.subr.mxu0 0.0
    %2432 = vmatpush1.msra.mxu0 0.0
    %2433 = vmatprep.subr.mxu0 0.0
    %2434 = vmatpush1.msra.mxu0 0.0
    %2435 = vmatprep.subr.mxu0 0.0
    %2436 = vmatpush1.msra.mxu0 0.0
    %2437 = vmatprep.subr.mxu0 0.0
    %2438 = vmatpush1.msra.mxu0 0.0
    %2439 = vmatprep.subr.mxu0 0.0
    %2440 = vmatpush1.msra.mxu0 0.0
    %2441 = vmatprep.subr.mxu0 0.0
    %2442 = vmatpush1.msra.mxu0 0.0
    %2443 = vmatprep.subr.mxu0 0.0
    %2444 = vmatpush1.msra.mxu0 0.0
    %2445 = vmatprep.subr.mxu0 0.0
    %2446 = vmatpush1.msra.mxu0 0.0
    %2447 = vmatprep.subr.mxu0 0.0
    %2448 = vmatpush1.msra.mxu0 0.0
    %2449 = vmatprep.subr.mxu0 0.0
    %2450 = vmatpush1.msra.mxu0 0.0
    %2451 = vmatprep.subr.mxu0 0.0
    %2452 = vmatpush1.msra.mxu0 0.0
    %2453 = vmatprep.subr.mxu0 0.0
    %2454 = vmatpush1.msra.mxu0 0.0
    %2455 = vmatprep.subr.mxu0 0.0
    %2456 = vmatpush1.msra.mxu0 0.0
    %2457 = vmatprep.subr.mxu0 0.0
    %2458 = vmatpush1.msra.mxu0 0.0
    %2459 = vmatprep.mubr.f32.mxu0 0.0
    %2460 = vmatmul.mubr.f32.gmra.mrb[0].mxu0 %v2393
    %v2461 = vpop.f32.mrb[0].mxu0
    %v2462 = vadd.f32 %v2388, %v2461
    %v2463 = vpop.f32.mrb[0].mxu0
    %2464 = vdwg.mxu0
    %vm2465 = vcmask 1024
    %2466 = vst.msk [vmem:[%s9] sm:$0x3] %vm2465, %v2462
    // Predicated region
    $region46: #{lstm_predictor_forward.1} parent=1 // pred_check
      _
    $region47: #{lstm_predictor_forward.1} parent=1 // pred_check_branch
      %2468 = sbr.rel (0) target = $region49
    $region48: #{lstm_predictor_forward.1} parent=1 // pred_region
      _
    $region49: #{lstm_predictor_forward.1} parent=1 // pred_fallthru
      _
    // Predicated region
    $region50: #{lstm_predictor_forward.1} parent=1 // pred_check
      _
    $region51: #{lstm_predictor_forward.1} parent=1 // pred_check_branch
      %2470 = sbr.rel (0) target = $region53
    $region52: #{lstm_predictor_forward.1} parent=1 // pred_region
      _
    $region53: #{lstm_predictor_forward.1} parent=1 // pred_fallthru
      _
    %2471 = vsyncpa [#allocation4], 1
    %2472 = vsyncpa [#allocation6], 1

</llo_original>
